<compile_context>
chip_gen: v5e
topology: v5e:2x2
jax: 0.10.0
libtpu: 0.0.40
codegen_flags: <defaults>
</compile_context>

<pallas_src>
import functools

import jax
import jax.numpy as jnp
from jax.experimental import pallas as pl
from jax.experimental.pallas import tpu as pltpu


# ----------------------------------------------------------------------------
# Fused Pallas kernel (one batch element per grid step)
# ----------------------------------------------------------------------------
def _resnet_block_kernel(x_ref, w1_ref, b1_ref, w2_ref, b2_ref, mask_ref, o_ref,
                         *, H, W, eps):
    Wp = W + 2                      # padded width
    L = (H - 1) * Wp + W            # contiguous flat span covering all outputs
    C = x_ref.shape[1]
    inv_npix = 1.0 / float(H * W)

    x = x_ref[0]                    # (C, Hp*Wp) f32, zero-padded flattened image
    mask = mask_ref[...]            # (1, L) f32, 1.0 at valid pixels
    x_bf = x.astype(jnp.bfloat16)

    def conv3x3(a_bf, w_ref, b_ref):
        # 3x3 / stride 1 / pad 1 conv = 9 shifted (Cout,Cin)@(Cin,L) MXU matmuls.
        acc = jnp.zeros((C, L), jnp.float32)
        for ki in range(3):
            for kj in range(3):
                s = ki * Wp + kj                       # static lane offset
                acc = acc + jnp.dot(w_ref[ki * 3 + kj], a_bf[:, s:s + L],
                                    preferred_element_type=jnp.float32)
        return acc + b_ref[...]                        # bias (C,1) broadcasts

    def inorm_relu(a):
        # InstanceNorm2d(affine=False) + ReLU; stats over valid pixels only.
        mean = jnp.sum(a * mask, axis=1, keepdims=True) * inv_npix
        d = (a - mean) * mask
        var = jnp.sum(d * d, axis=1, keepdims=True) * inv_npix
        y = (a - mean) * jax.lax.rsqrt(var + eps)
        return jnp.maximum(y, 0.0) * mask              # re-zero pad columns

    # conv1 -> IN -> ReLU
    y1 = inorm_relu(conv3x3(x_bf, w1_ref, b1_ref))

    # Re-embed y1 into the zero-padded flat layout for conv2 (pad ring = zeros).
    zpad = jnp.zeros((C, Wp + 1), jnp.bfloat16)
    h_bf = jnp.concatenate([zpad, y1.astype(jnp.bfloat16), zpad], axis=1)

    # conv2 -> IN -> ReLU
    y2 = inorm_relu(conv3x3(h_bf, w2_ref, b2_ref))

    # Residual skip in f32 (valid-pixel slice of the original padded input).
    o_ref[0] = x[:, Wp + 1:Wp + 1 + L] + y2


# ----------------------------------------------------------------------------
# Wrapper
# ----------------------------------------------------------------------------
def resnet_block_forward(params, x, *, eps=1e-5):
    N, C, H, W = x.shape
    Hp, Wp = H + 2, W + 2
    L = (H - 1) * Wp + W

    # Host glue: pad once (1x data), flatten spatial, prep weights/bias/mask.
    xp = jnp.pad(x, ((0, 0), (0, 0), (1, 1), (1, 1))).reshape(N, C, Hp * Wp)
    w1 = params["w1"].transpose(2, 3, 0, 1).reshape(9, C, C).astype(jnp.bfloat16)
    w2 = params["w2"].transpose(2, 3, 0, 1).reshape(9, C, C).astype(jnp.bfloat16)
    b1 = params["b1"].reshape(C, 1).astype(jnp.float32)
    b2 = params["b2"].reshape(C, 1).astype(jnp.float32)
    mask = ((jnp.arange(L) % Wp) < W).astype(jnp.float32).reshape(1, L)

    kernel = functools.partial(_resnet_block_kernel, H=H, W=W, eps=eps)
    out_l = pl.pallas_call(
        kernel,
        out_shape=jax.ShapeDtypeStruct((N, C, L), jnp.float32),
        grid=(N,),
        in_specs=[
            pl.BlockSpec((1, C, Hp * Wp), lambda n: (n, 0, 0)),   # image n
            pl.BlockSpec((9, C, C), lambda n: (0, 0, 0)),         # w1 taps
            pl.BlockSpec((C, 1), lambda n: (0, 0)),               # b1
            pl.BlockSpec((9, C, C), lambda n: (0, 0, 0)),         # w2 taps
            pl.BlockSpec((C, 1), lambda n: (0, 0)),               # b2
            pl.BlockSpec((1, L), lambda n: (0, 0)),               # valid mask
        ],
        out_specs=pl.BlockSpec((1, C, L), lambda n: (n, 0, 0)),
        compiler_params=pltpu.CompilerParams(
            dimension_semantics=("parallel",)),
    )(xp, w1, b1, w2, b2, mask)

    # Strip interleaved row-padding columns: (N, C, L) -> (N, C, H, W).
    out = jnp.pad(out_l, ((0, 0), (0, 0), (0, Wp - W)))
    return out.reshape(N, C, H, Wp)[:, :, :, :W]


# ----------------------------------------------------------------------------
# Params + demo
# ----------------------------------------------------------------------------
def init_params(key, dim):
    k1, k2, k3, k4 = jax.random.split(key, 4)
    std = 1.0 / jnp.sqrt(jnp.float32(dim * 9))
    return {
        "w1": jax.random.normal(k1, (dim, dim, 3, 3), jnp.float32) * std,
        "b1": 0.01 * jax.random.normal(k2, (dim,), jnp.float32),
        "w2": jax.random.normal(k3, (dim, dim, 3, 3), jnp.float32) * std,
        "b2": 0.01 * jax.random.normal(k4, (dim,), jnp.float32),
    }


if __name__ == "__main__":
    key = jax.random.PRNGKey(0)
    kp, kx = jax.random.split(key)

    N, C, H, W = 2, 32, 16, 16          # input_dim == output_dim (skip connection)
    params = init_params(kp, C)
    x = jax.random.normal(kx, (N, C, H, W), jnp.float32)

    out = jax.jit(resnet_block_forward)(params, x)
    out = jax.block_until_ready(out)

    assert out.shape == (N, C, H, W), out.shape
    assert bool(jnp.all(jnp.isfinite(out)))
    print("KERNEL_OK")
</pallas_src>

<mosaic_0001>
module attributes {stable_mosaic.version = 11 : i64} {
  func.func @_resnet_block_kernel(%arg0: i32, %arg1: memref<1x32x324xf32, #tpu.memory_space<vmem>>, %arg2: memref<9x32x32xbf16, #tpu.memory_space<vmem>>, %arg3: memref<32x1xf32, #tpu.memory_space<vmem>>, %arg4: memref<9x32x32xbf16, #tpu.memory_space<vmem>>, %arg5: memref<32x1xf32, #tpu.memory_space<vmem>>, %arg6: memref<1x286xf32, #tpu.memory_space<vmem>>, %arg7: memref<1x32x286xf32, #tpu.memory_space<vmem>>) attributes {dimension_semantics = [#tpu.dimension_semantics<parallel>], iteration_bounds = array<i64: 2>, scalar_prefetch = 0 : i64, scratch_operands = 0 : i64, tpu.core_type = #tpu.core_type<tc>, window_params = [{transform_indices = @transform_0, window_bounds = array<i64: 1, 32, 324>}, {pipeline_mode = #tpu.pipeline_mode<synchronous>, transform_indices = @transform_1, window_bounds = array<i64: 9, 32, 32>}, {pipeline_mode = #tpu.pipeline_mode<synchronous>, transform_indices = @transform_2, window_bounds = array<i64: 32, 1>}, {pipeline_mode = #tpu.pipeline_mode<synchronous>, transform_indices = @transform_3, window_bounds = array<i64: 9, 32, 32>}, {pipeline_mode = #tpu.pipeline_mode<synchronous>, transform_indices = @transform_4, window_bounds = array<i64: 32, 1>}, {pipeline_mode = #tpu.pipeline_mode<synchronous>, transform_indices = @transform_5, window_bounds = array<i64: 1, 286>}, {transform_indices = @transform_6, window_bounds = array<i64: 1, 32, 286>}]} {
    %c0 = arith.constant 0 : index
    %c0_0 = arith.constant 0 : index
    %c0_1 = arith.constant 0 : index
    %0 = vector.load %arg1[%c0, %c0_0, %c0_1] : memref<1x32x324xf32, #tpu.memory_space<vmem>>, vector<1x32x324xf32>
    %1 = vector.shape_cast %0 : vector<1x32x324xf32> to vector<32x324xf32>
    %c0_2 = arith.constant 0 : index
    %c0_3 = arith.constant 0 : index
    %2 = vector.load %arg6[%c0_2, %c0_3] : memref<1x286xf32, #tpu.memory_space<vmem>>, vector<1x286xf32>
    %3 = arith.truncf %1 : vector<32x324xf32> to vector<32x324xbf16>
    %cst = arith.constant 0.000000e+00 : f32
    %4 = vector.broadcast %cst : f32 to vector<32x286xf32>
    %c0_4 = arith.constant 0 : index
    %c0_5 = arith.constant 0 : index
    %c0_6 = arith.constant 0 : index
    %5 = vector.load %arg2[%c0_4, %c0_5, %c0_6] : memref<9x32x32xbf16, #tpu.memory_space<vmem>>, vector<1x32x32xbf16>
    %6 = vector.shape_cast %5 : vector<1x32x32xbf16> to vector<32x32xbf16>
    %7 = vector.extract_strided_slice %3 {offsets = [0, 0], sizes = [32, 286], strides = [1, 1]} : vector<32x324xbf16> to vector<32x286xbf16>
    %cst_7 = arith.constant dense<0.000000e+00> : vector<32x286xf32>
    %8 = tpu.matmul %6, %7, %cst_7 {dimension_numbers = #tpu.dot_dimension_numbers<[1], [0], [0], [1], [0, 0, 1, 1], [], []>} : vector<32x32xbf16>, vector<32x286xbf16>, vector<32x286xf32> -> vector<32x286xf32>
    %9 = arith.addf %4, %8 : vector<32x286xf32>
    %c1 = arith.constant 1 : index
    %c0_8 = arith.constant 0 : index
    %c0_9 = arith.constant 0 : index
    %10 = vector.load %arg2[%c1, %c0_8, %c0_9] : memref<9x32x32xbf16, #tpu.memory_space<vmem>>, vector<1x32x32xbf16>
    %11 = vector.shape_cast %10 : vector<1x32x32xbf16> to vector<32x32xbf16>
    %12 = vector.extract_strided_slice %3 {offsets = [0, 1], sizes = [32, 286], strides = [1, 1]} : vector<32x324xbf16> to vector<32x286xbf16>
    %cst_10 = arith.constant dense<0.000000e+00> : vector<32x286xf32>
    %13 = tpu.matmul %11, %12, %cst_10 {dimension_numbers = #tpu.dot_dimension_numbers<[1], [0], [0], [1], [0, 0, 1, 1], [], []>} : vector<32x32xbf16>, vector<32x286xbf16>, vector<32x286xf32> -> vector<32x286xf32>
    %14 = arith.addf %9, %13 : vector<32x286xf32>
    %c2 = arith.constant 2 : index
    %c0_11 = arith.constant 0 : index
    %c0_12 = arith.constant 0 : index
    %15 = vector.load %arg2[%c2, %c0_11, %c0_12] : memref<9x32x32xbf16, #tpu.memory_space<vmem>>, vector<1x32x32xbf16>
    %16 = vector.shape_cast %15 : vector<1x32x32xbf16> to vector<32x32xbf16>
    %17 = vector.extract_strided_slice %3 {offsets = [0, 2], sizes = [32, 286], strides = [1, 1]} : vector<32x324xbf16> to vector<32x286xbf16>
    %cst_13 = arith.constant dense<0.000000e+00> : vector<32x286xf32>
    %18 = tpu.matmul %16, %17, %cst_13 {dimension_numbers = #tpu.dot_dimension_numbers<[1], [0], [0], [1], [0, 0, 1, 1], [], []>} : vector<32x32xbf16>, vector<32x286xbf16>, vector<32x286xf32> -> vector<32x286xf32>
    %19 = arith.addf %14, %18 : vector<32x286xf32>
    %c3 = arith.constant 3 : index
    %c0_14 = arith.constant 0 : index
    %c0_15 = arith.constant 0 : index
    %20 = vector.load %arg2[%c3, %c0_14, %c0_15] : memref<9x32x32xbf16, #tpu.memory_space<vmem>>, vector<1x32x32xbf16>
    %21 = vector.shape_cast %20 : vector<1x32x32xbf16> to vector<32x32xbf16>
    %22 = vector.extract_strided_slice %3 {offsets = [0, 18], sizes = [32, 286], strides = [1, 1]} : vector<32x324xbf16> to vector<32x286xbf16>
    %cst_16 = arith.constant dense<0.000000e+00> : vector<32x286xf32>
    %23 = tpu.matmul %21, %22, %cst_16 {dimension_numbers = #tpu.dot_dimension_numbers<[1], [0], [0], [1], [0, 0, 1, 1], [], []>} : vector<32x32xbf16>, vector<32x286xbf16>, vector<32x286xf32> -> vector<32x286xf32>
    %24 = arith.addf %19, %23 : vector<32x286xf32>
    %c4 = arith.constant 4 : index
    %c0_17 = arith.constant 0 : index
    %c0_18 = arith.constant 0 : index
    %25 = vector.load %arg2[%c4, %c0_17, %c0_18] : memref<9x32x32xbf16, #tpu.memory_space<vmem>>, vector<1x32x32xbf16>
    %26 = vector.shape_cast %25 : vector<1x32x32xbf16> to vector<32x32xbf16>
    %27 = vector.extract_strided_slice %3 {offsets = [0, 19], sizes = [32, 286], strides = [1, 1]} : vector<32x324xbf16> to vector<32x286xbf16>
    %cst_19 = arith.constant dense<0.000000e+00> : vector<32x286xf32>
    %28 = tpu.matmul %26, %27, %cst_19 {dimension_numbers = #tpu.dot_dimension_numbers<[1], [0], [0], [1], [0, 0, 1, 1], [], []>} : vector<32x32xbf16>, vector<32x286xbf16>, vector<32x286xf32> -> vector<32x286xf32>
    %29 = arith.addf %24, %28 : vector<32x286xf32>
    %c5 = arith.constant 5 : index
    %c0_20 = arith.constant 0 : index
    %c0_21 = arith.constant 0 : index
    %30 = vector.load %arg2[%c5, %c0_20, %c0_21] : memref<9x32x32xbf16, #tpu.memory_space<vmem>>, vector<1x32x32xbf16>
    %31 = vector.shape_cast %30 : vector<1x32x32xbf16> to vector<32x32xbf16>
    %32 = vector.extract_strided_slice %3 {offsets = [0, 20], sizes = [32, 286], strides = [1, 1]} : vector<32x324xbf16> to vector<32x286xbf16>
    %cst_22 = arith.constant dense<0.000000e+00> : vector<32x286xf32>
    %33 = tpu.matmul %31, %32, %cst_22 {dimension_numbers = #tpu.dot_dimension_numbers<[1], [0], [0], [1], [0, 0, 1, 1], [], []>} : vector<32x32xbf16>, vector<32x286xbf16>, vector<32x286xf32> -> vector<32x286xf32>
    %34 = arith.addf %29, %33 : vector<32x286xf32>
    %c6 = arith.constant 6 : index
    %c0_23 = arith.constant 0 : index
    %c0_24 = arith.constant 0 : index
    %35 = vector.load %arg2[%c6, %c0_23, %c0_24] : memref<9x32x32xbf16, #tpu.memory_space<vmem>>, vector<1x32x32xbf16>
    %36 = vector.shape_cast %35 : vector<1x32x32xbf16> to vector<32x32xbf16>
    %37 = vector.extract_strided_slice %3 {offsets = [0, 36], sizes = [32, 286], strides = [1, 1]} : vector<32x324xbf16> to vector<32x286xbf16>
    %cst_25 = arith.constant dense<0.000000e+00> : vector<32x286xf32>
    %38 = tpu.matmul %36, %37, %cst_25 {dimension_numbers = #tpu.dot_dimension_numbers<[1], [0], [0], [1], [0, 0, 1, 1], [], []>} : vector<32x32xbf16>, vector<32x286xbf16>, vector<32x286xf32> -> vector<32x286xf32>
    %39 = arith.addf %34, %38 : vector<32x286xf32>
    %c7 = arith.constant 7 : index
    %c0_26 = arith.constant 0 : index
    %c0_27 = arith.constant 0 : index
    %40 = vector.load %arg2[%c7, %c0_26, %c0_27] : memref<9x32x32xbf16, #tpu.memory_space<vmem>>, vector<1x32x32xbf16>
    %41 = vector.shape_cast %40 : vector<1x32x32xbf16> to vector<32x32xbf16>
    %42 = vector.extract_strided_slice %3 {offsets = [0, 37], sizes = [32, 286], strides = [1, 1]} : vector<32x324xbf16> to vector<32x286xbf16>
    %cst_28 = arith.constant dense<0.000000e+00> : vector<32x286xf32>
    %43 = tpu.matmul %41, %42, %cst_28 {dimension_numbers = #tpu.dot_dimension_numbers<[1], [0], [0], [1], [0, 0, 1, 1], [], []>} : vector<32x32xbf16>, vector<32x286xbf16>, vector<32x286xf32> -> vector<32x286xf32>
    %44 = arith.addf %39, %43 : vector<32x286xf32>
    %c8 = arith.constant 8 : index
    %c0_29 = arith.constant 0 : index
    %c0_30 = arith.constant 0 : index
    %45 = vector.load %arg2[%c8, %c0_29, %c0_30] : memref<9x32x32xbf16, #tpu.memory_space<vmem>>, vector<1x32x32xbf16>
    %46 = vector.shape_cast %45 : vector<1x32x32xbf16> to vector<32x32xbf16>
    %47 = vector.extract_strided_slice %3 {offsets = [0, 38], sizes = [32, 286], strides = [1, 1]} : vector<32x324xbf16> to vector<32x286xbf16>
    %cst_31 = arith.constant dense<0.000000e+00> : vector<32x286xf32>
    %48 = tpu.matmul %46, %47, %cst_31 {dimension_numbers = #tpu.dot_dimension_numbers<[1], [0], [0], [1], [0, 0, 1, 1], [], []>} : vector<32x32xbf16>, vector<32x286xbf16>, vector<32x286xf32> -> vector<32x286xf32>
    %49 = arith.addf %44, %48 : vector<32x286xf32>
    %c0_32 = arith.constant 0 : index
    %c0_33 = arith.constant 0 : index
    %50 = vector.load %arg3[%c0_32, %c0_33] : memref<32x1xf32, #tpu.memory_space<vmem>>, vector<32x1xf32>
    %51 = vector.broadcast %50 : vector<32x1xf32> to vector<32x286xf32>
    %52 = arith.addf %49, %51 : vector<32x286xf32>
    %53 = vector.broadcast %2 : vector<1x286xf32> to vector<32x286xf32>
    %54 = arith.mulf %52, %53 : vector<32x286xf32>
    %cst_34 = arith.constant dense<0.000000e+00> : vector<32xf32>
    %55 = vector.multi_reduction <add>, %54, %cst_34 [1] : vector<32x286xf32> to vector<32xf32>
    %56 = vector.shape_cast %55 : vector<32xf32> to vector<32x1xf32>
    %cst_35 = arith.constant 3.906250e-03 : f32
    %57 = vector.broadcast %cst_35 : f32 to vector<32x1xf32>
    %58 = arith.mulf %56, %57 : vector<32x1xf32>
    %59 = vector.broadcast %58 : vector<32x1xf32> to vector<32x286xf32>
    %60 = arith.subf %52, %59 : vector<32x286xf32>
    %61 = vector.broadcast %2 : vector<1x286xf32> to vector<32x286xf32>
    %62 = arith.mulf %60, %61 : vector<32x286xf32>
    %63 = arith.mulf %62, %62 : vector<32x286xf32>
    %cst_36 = arith.constant dense<0.000000e+00> : vector<32xf32>
    %64 = vector.multi_reduction <add>, %63, %cst_36 [1] : vector<32x286xf32> to vector<32xf32>
    %65 = vector.shape_cast %64 : vector<32xf32> to vector<32x1xf32>
    %cst_37 = arith.constant 3.906250e-03 : f32
    %66 = vector.broadcast %cst_37 : f32 to vector<32x1xf32>
    %67 = arith.mulf %65, %66 : vector<32x1xf32>
    %68 = vector.broadcast %58 : vector<32x1xf32> to vector<32x286xf32>
    %69 = arith.subf %52, %68 : vector<32x286xf32>
    %cst_38 = arith.constant 9.99999974E-6 : f32
    %70 = vector.broadcast %cst_38 : f32 to vector<32x1xf32>
    %71 = arith.addf %67, %70 : vector<32x1xf32>
    %72 = math.rsqrt %71 : vector<32x1xf32>
    %73 = vector.broadcast %72 : vector<32x1xf32> to vector<32x286xf32>
    %74 = arith.mulf %69, %73 : vector<32x286xf32>
    %cst_39 = arith.constant 0.000000e+00 : f32
    %75 = vector.broadcast %cst_39 : f32 to vector<32x286xf32>
    %76 = arith.maximumf %74, %75 : vector<32x286xf32>
    %77 = vector.broadcast %2 : vector<1x286xf32> to vector<32x286xf32>
    %78 = arith.mulf %76, %77 : vector<32x286xf32>
    %cst_40 = arith.constant 0.000000e+00 : bf16
    %79 = vector.broadcast %cst_40 : bf16 to vector<32x19xbf16>
    %80 = arith.truncf %78 : vector<32x286xf32> to vector<32x286xbf16>
    %81 = tpu.concatenate %79, %80, %79 in 1 : vector<32x19xbf16>, vector<32x286xbf16>, vector<32x19xbf16> -> vector<32x324xbf16>
    %cst_41 = arith.constant 0.000000e+00 : f32
    %82 = vector.broadcast %cst_41 : f32 to vector<32x286xf32>
    %c0_42 = arith.constant 0 : index
    %c0_43 = arith.constant 0 : index
    %c0_44 = arith.constant 0 : index
    %83 = vector.load %arg4[%c0_42, %c0_43, %c0_44] : memref<9x32x32xbf16, #tpu.memory_space<vmem>>, vector<1x32x32xbf16>
    %84 = vector.shape_cast %83 : vector<1x32x32xbf16> to vector<32x32xbf16>
    %85 = vector.extract_strided_slice %81 {offsets = [0, 0], sizes = [32, 286], strides = [1, 1]} : vector<32x324xbf16> to vector<32x286xbf16>
    %cst_45 = arith.constant dense<0.000000e+00> : vector<32x286xf32>
    %86 = tpu.matmul %84, %85, %cst_45 {dimension_numbers = #tpu.dot_dimension_numbers<[1], [0], [0], [1], [0, 0, 1, 1], [], []>} : vector<32x32xbf16>, vector<32x286xbf16>, vector<32x286xf32> -> vector<32x286xf32>
    %87 = arith.addf %82, %86 : vector<32x286xf32>
    %c1_46 = arith.constant 1 : index
    %c0_47 = arith.constant 0 : index
    %c0_48 = arith.constant 0 : index
    %88 = vector.load %arg4[%c1_46, %c0_47, %c0_48] : memref<9x32x32xbf16, #tpu.memory_space<vmem>>, vector<1x32x32xbf16>
    %89 = vector.shape_cast %88 : vector<1x32x32xbf16> to vector<32x32xbf16>
    %90 = vector.extract_strided_slice %81 {offsets = [0, 1], sizes = [32, 286], strides = [1, 1]} : vector<32x324xbf16> to vector<32x286xbf16>
    %cst_49 = arith.constant dense<0.000000e+00> : vector<32x286xf32>
    %91 = tpu.matmul %89, %90, %cst_49 {dimension_numbers = #tpu.dot_dimension_numbers<[1], [0], [0], [1], [0, 0, 1, 1], [], []>} : vector<32x32xbf16>, vector<32x286xbf16>, vector<32x286xf32> -> vector<32x286xf32>
    %92 = arith.addf %87, %91 : vector<32x286xf32>
    %c2_50 = arith.constant 2 : index
    %c0_51 = arith.constant 0 : index
    %c0_52 = arith.constant 0 : index
    %93 = vector.load %arg4[%c2_50, %c0_51, %c0_52] : memref<9x32x32xbf16, #tpu.memory_space<vmem>>, vector<1x32x32xbf16>
    %94 = vector.shape_cast %93 : vector<1x32x32xbf16> to vector<32x32xbf16>
    %95 = vector.extract_strided_slice %81 {offsets = [0, 2], sizes = [32, 286], strides = [1, 1]} : vector<32x324xbf16> to vector<32x286xbf16>
    %cst_53 = arith.constant dense<0.000000e+00> : vector<32x286xf32>
    %96 = tpu.matmul %94, %95, %cst_53 {dimension_numbers = #tpu.dot_dimension_numbers<[1], [0], [0], [1], [0, 0, 1, 1], [], []>} : vector<32x32xbf16>, vector<32x286xbf16>, vector<32x286xf32> -> vector<32x286xf32>
    %97 = arith.addf %92, %96 : vector<32x286xf32>
    %c3_54 = arith.constant 3 : index
    %c0_55 = arith.constant 0 : index
    %c0_56 = arith.constant 0 : index
    %98 = vector.load %arg4[%c3_54, %c0_55, %c0_56] : memref<9x32x32xbf16, #tpu.memory_space<vmem>>, vector<1x32x32xbf16>
    %99 = vector.shape_cast %98 : vector<1x32x32xbf16> to vector<32x32xbf16>
    %100 = vector.extract_strided_slice %81 {offsets = [0, 18], sizes = [32, 286], strides = [1, 1]} : vector<32x324xbf16> to vector<32x286xbf16>
    %cst_57 = arith.constant dense<0.000000e+00> : vector<32x286xf32>
    %101 = tpu.matmul %99, %100, %cst_57 {dimension_numbers = #tpu.dot_dimension_numbers<[1], [0], [0], [1], [0, 0, 1, 1], [], []>} : vector<32x32xbf16>, vector<32x286xbf16>, vector<32x286xf32> -> vector<32x286xf32>
    %102 = arith.addf %97, %101 : vector<32x286xf32>
    %c4_58 = arith.constant 4 : index
    %c0_59 = arith.constant 0 : index
    %c0_60 = arith.constant 0 : index
    %103 = vector.load %arg4[%c4_58, %c0_59, %c0_60] : memref<9x32x32xbf16, #tpu.memory_space<vmem>>, vector<1x32x32xbf16>
    %104 = vector.shape_cast %103 : vector<1x32x32xbf16> to vector<32x32xbf16>
    %105 = vector.extract_strided_slice %81 {offsets = [0, 19], sizes = [32, 286], strides = [1, 1]} : vector<32x324xbf16> to vector<32x286xbf16>
    %cst_61 = arith.constant dense<0.000000e+00> : vector<32x286xf32>
    %106 = tpu.matmul %104, %105, %cst_61 {dimension_numbers = #tpu.dot_dimension_numbers<[1], [0], [0], [1], [0, 0, 1, 1], [], []>} : vector<32x32xbf16>, vector<32x286xbf16>, vector<32x286xf32> -> vector<32x286xf32>
    %107 = arith.addf %102, %106 : vector<32x286xf32>
    %c5_62 = arith.constant 5 : index
    %c0_63 = arith.constant 0 : index
    %c0_64 = arith.constant 0 : index
    %108 = vector.load %arg4[%c5_62, %c0_63, %c0_64] : memref<9x32x32xbf16, #tpu.memory_space<vmem>>, vector<1x32x32xbf16>
    %109 = vector.shape_cast %108 : vector<1x32x32xbf16> to vector<32x32xbf16>
    %110 = vector.extract_strided_slice %81 {offsets = [0, 20], sizes = [32, 286], strides = [1, 1]} : vector<32x324xbf16> to vector<32x286xbf16>
    %cst_65 = arith.constant dense<0.000000e+00> : vector<32x286xf32>
    %111 = tpu.matmul %109, %110, %cst_65 {dimension_numbers = #tpu.dot_dimension_numbers<[1], [0], [0], [1], [0, 0, 1, 1], [], []>} : vector<32x32xbf16>, vector<32x286xbf16>, vector<32x286xf32> -> vector<32x286xf32>
    %112 = arith.addf %107, %111 : vector<32x286xf32>
    %c6_66 = arith.constant 6 : index
    %c0_67 = arith.constant 0 : index
    %c0_68 = arith.constant 0 : index
    %113 = vector.load %arg4[%c6_66, %c0_67, %c0_68] : memref<9x32x32xbf16, #tpu.memory_space<vmem>>, vector<1x32x32xbf16>
    %114 = vector.shape_cast %113 : vector<1x32x32xbf16> to vector<32x32xbf16>
    %115 = vector.extract_strided_slice %81 {offsets = [0, 36], sizes = [32, 286], strides = [1, 1]} : vector<32x324xbf16> to vector<32x286xbf16>
    %cst_69 = arith.constant dense<0.000000e+00> : vector<32x286xf32>
    %116 = tpu.matmul %114, %115, %cst_69 {dimension_numbers = #tpu.dot_dimension_numbers<[1], [0], [0], [1], [0, 0, 1, 1], [], []>} : vector<32x32xbf16>, vector<32x286xbf16>, vector<32x286xf32> -> vector<32x286xf32>
    %117 = arith.addf %112, %116 : vector<32x286xf32>
    %c7_70 = arith.constant 7 : index
    %c0_71 = arith.constant 0 : index
    %c0_72 = arith.constant 0 : index
    %118 = vector.load %arg4[%c7_70, %c0_71, %c0_72] : memref<9x32x32xbf16, #tpu.memory_space<vmem>>, vector<1x32x32xbf16>
    %119 = vector.shape_cast %118 : vector<1x32x32xbf16> to vector<32x32xbf16>
    %120 = vector.extract_strided_slice %81 {offsets = [0, 37], sizes = [32, 286], strides = [1, 1]} : vector<32x324xbf16> to vector<32x286xbf16>
    %cst_73 = arith.constant dense<0.000000e+00> : vector<32x286xf32>
    %121 = tpu.matmul %119, %120, %cst_73 {dimension_numbers = #tpu.dot_dimension_numbers<[1], [0], [0], [1], [0, 0, 1, 1], [], []>} : vector<32x32xbf16>, vector<32x286xbf16>, vector<32x286xf32> -> vector<32x286xf32>
    %122 = arith.addf %117, %121 : vector<32x286xf32>
    %c8_74 = arith.constant 8 : index
    %c0_75 = arith.constant 0 : index
    %c0_76 = arith.constant 0 : index
    %123 = vector.load %arg4[%c8_74, %c0_75, %c0_76] : memref<9x32x32xbf16, #tpu.memory_space<vmem>>, vector<1x32x32xbf16>
    %124 = vector.shape_cast %123 : vector<1x32x32xbf16> to vector<32x32xbf16>
    %125 = vector.extract_strided_slice %81 {offsets = [0, 38], sizes = [32, 286], strides = [1, 1]} : vector<32x324xbf16> to vector<32x286xbf16>
    %cst_77 = arith.constant dense<0.000000e+00> : vector<32x286xf32>
    %126 = tpu.matmul %124, %125, %cst_77 {dimension_numbers = #tpu.dot_dimension_numbers<[1], [0], [0], [1], [0, 0, 1, 1], [], []>} : vector<32x32xbf16>, vector<32x286xbf16>, vector<32x286xf32> -> vector<32x286xf32>
    %127 = arith.addf %122, %126 : vector<32x286xf32>
    %c0_78 = arith.constant 0 : index
    %c0_79 = arith.constant 0 : index
    %128 = vector.load %arg5[%c0_78, %c0_79] : memref<32x1xf32, #tpu.memory_space<vmem>>, vector<32x1xf32>
    %129 = vector.broadcast %128 : vector<32x1xf32> to vector<32x286xf32>
    %130 = arith.addf %127, %129 : vector<32x286xf32>
    %131 = vector.broadcast %2 : vector<1x286xf32> to vector<32x286xf32>
    %132 = arith.mulf %130, %131 : vector<32x286xf32>
    %cst_80 = arith.constant dense<0.000000e+00> : vector<32xf32>
    %133 = vector.multi_reduction <add>, %132, %cst_80 [1] : vector<32x286xf32> to vector<32xf32>
    %134 = vector.shape_cast %133 : vector<32xf32> to vector<32x1xf32>
    %cst_81 = arith.constant 3.906250e-03 : f32
    %135 = vector.broadcast %cst_81 : f32 to vector<32x1xf32>
    %136 = arith.mulf %134, %135 : vector<32x1xf32>
    %137 = vector.broadcast %136 : vector<32x1xf32> to vector<32x286xf32>
    %138 = arith.subf %130, %137 : vector<32x286xf32>
    %139 = vector.broadcast %2 : vector<1x286xf32> to vector<32x286xf32>
    %140 = arith.mulf %138, %139 : vector<32x286xf32>
    %141 = arith.mulf %140, %140 : vector<32x286xf32>
    %cst_82 = arith.constant dense<0.000000e+00> : vector<32xf32>
    %142 = vector.multi_reduction <add>, %141, %cst_82 [1] : vector<32x286xf32> to vector<32xf32>
    %143 = vector.shape_cast %142 : vector<32xf32> to vector<32x1xf32>
    %cst_83 = arith.constant 3.906250e-03 : f32
    %144 = vector.broadcast %cst_83 : f32 to vector<32x1xf32>
    %145 = arith.mulf %143, %144 : vector<32x1xf32>
    %146 = vector.broadcast %136 : vector<32x1xf32> to vector<32x286xf32>
    %147 = arith.subf %130, %146 : vector<32x286xf32>
    %cst_84 = arith.constant 9.99999974E-6 : f32
    %148 = vector.broadcast %cst_84 : f32 to vector<32x1xf32>
    %149 = arith.addf %145, %148 : vector<32x1xf32>
    %150 = math.rsqrt %149 : vector<32x1xf32>
    %151 = vector.broadcast %150 : vector<32x1xf32> to vector<32x286xf32>
    %152 = arith.mulf %147, %151 : vector<32x286xf32>
    %cst_85 = arith.constant 0.000000e+00 : f32
    %153 = vector.broadcast %cst_85 : f32 to vector<32x286xf32>
    %154 = arith.maximumf %152, %153 : vector<32x286xf32>
    %155 = vector.broadcast %2 : vector<1x286xf32> to vector<32x286xf32>
    %156 = arith.mulf %154, %155 : vector<32x286xf32>
    %157 = vector.extract_strided_slice %1 {offsets = [0, 19], sizes = [32, 286], strides = [1, 1]} : vector<32x324xf32> to vector<32x286xf32>
    %158 = arith.addf %157, %156 : vector<32x286xf32>
    %c0_86 = arith.constant 0 : index
    %c0_87 = arith.constant 0 : index
    %c0_88 = arith.constant 0 : index
    %159 = vector.load %arg7[%c0_86, %c0_87, %c0_88] : memref<1x32x286xf32, #tpu.memory_space<vmem>>, vector<1x32x286xf32>
    %160 = vector.shape_cast %159 : vector<1x32x286xf32> to vector<32x286xf32>
    %161 = vector.shape_cast %158 : vector<32x286xf32> to vector<1x32x286xf32>
    tpu.vector_store %arg7[%c0_86, %c0_87, %c0_88], %161 {strides = array<i32>} : memref<1x32x286xf32, #tpu.memory_space<vmem>>, vector<1x32x286xf32>,
    return
  }
  func.func @transform_0(%arg0: i32) -> (i32, i32, i32) {
    %c0_i32 = arith.constant 0 : i32
    %c0_i32_0 = arith.constant 0 : i32
    %c0_i32_1 = arith.constant 0 : i32
    return %arg0, %c0_i32, %c0_i32_0 : i32, i32, i32
  }
  func.func @transform_1(%arg0: i32) -> (i32, i32, i32) {
    %c0_i32 = arith.constant 0 : i32
    %c0_i32_0 = arith.constant 0 : i32
    %c0_i32_1 = arith.constant 0 : i32
    %c0_i32_2 = arith.constant 0 : i32
    return %c0_i32, %c0_i32_0, %c0_i32_1 : i32, i32, i32
  }
  func.func @transform_2(%arg0: i32) -> (i32, i32) {
    %c0_i32 = arith.constant 0 : i32
    %c0_i32_0 = arith.constant 0 : i32
    %c0_i32_1 = arith.constant 0 : i32
    return %c0_i32, %c0_i32_0 : i32, i32
  }
  func.func @transform_3(%arg0: i32) -> (i32, i32, i32) {
    %c0_i32 = arith.constant 0 : i32
    %c0_i32_0 = arith.constant 0 : i32
    %c0_i32_1 = arith.constant 0 : i32
    %c0_i32_2 = arith.constant 0 : i32
    return %c0_i32, %c0_i32_0, %c0_i32_1 : i32, i32, i32
  }
  func.func @transform_4(%arg0: i32) -> (i32, i32) {
    %c0_i32 = arith.constant 0 : i32
    %c0_i32_0 = arith.constant 0 : i32
    %c0_i32_1 = arith.constant 0 : i32
    return %c0_i32, %c0_i32_0 : i32, i32
  }
  func.func @transform_5(%arg0: i32) -> (i32, i32) {
    %c0_i32 = arith.constant 0 : i32
    %c0_i32_0 = arith.constant 0 : i32
    %c0_i32_1 = arith.constant 0 : i32
    return %c0_i32, %c0_i32_0 : i32, i32
  }
  func.func @transform_6(%arg0: i32) -> (i32, i32, i32) {
    %c0_i32 = arith.constant 0 : i32
    %c0_i32_0 = arith.constant 0 : i32
    %c0_i32_1 = arith.constant 0 : i32
    return %arg0, %c0_i32, %c0_i32_0 : i32, i32, i32
  }
}

</mosaic_0001>

<llo_original>
// kernel: resnet_block_forward.1
$region0: #{resnet_block_forward.1}
  #allocation0 [shape = 'u32[]', space=smem, size = 0x4, offset = 0x4, fixed_abs, tag = 'smem constant byte address 0x4 - core index']
  #allocation1 [shape = 'u32[72,128]{1,0:T(1,128)}', space=vmem, size = 0x9000, scoped, tag = 'internal scratch']
  %s0 = inlined_call_operand.vmem [shape: f32[2,32,324], index: 0, kind: input, shape index: {}]
  %s1 = inlined_call_operand.vmem [shape: bf16[9,32,32], index: 1, kind: input, shape index: {}]
  %s2 = inlined_call_operand.vmem [shape: f32[32,1], index: 2, kind: input, shape index: {}]
  %s3 = inlined_call_operand.vmem [shape: bf16[9,32,32], index: 3, kind: input, shape index: {}]
  %s4 = inlined_call_operand.vmem [shape: f32[32,1], index: 4, kind: input, shape index: {}]
  %s5 = inlined_call_operand.vmem [shape: f32[1,286], index: 5, kind: input, shape index: {}]
  %s6 = inlined_call_operand.vmem [shape: f32[2,32,286], index: 6, kind: output, shape index: {}]
  %s7 = sld [smem:[#allocation0]]
  $region57: #{resnet_block_forward.1} parent=0
    _
  %s9 = ssub.s32 1, %s7
  %s10 = scalar_select 0, %s9, %s7
  loop: start=0, step=1, limit=4
  $region2: #{resnet_block_forward.1} parent=0 // loop_pre_header
    _
  $region3: #{resnet_block_forward.1} parent=0 // loop_header
    %s12 = sphi 0, %s16
    %p13 = scmp.ge.s32.totalorder %s12, 4
    %s22 = sphi 0, %s24
    %s25 = sphi 0, %s22
    %s26 = sphi 0, %s25
    %s42 = sphi 0, %s26
    %s46 = sphi 0, %s46
    %s48 = sphi 0, %s46
    %s49 = sphi 0, %s48
    %s63 = sphi 0, %s49
    %s67 = sphi 0, %s67
    %s69 = sphi 0, %s67
    %s70 = sphi 0, %s69
    %s84 = sphi 0, %s70
    %s88 = sphi 0, %s88
    %s90 = sphi 0, %s88
    %s91 = sphi 0, %s90
    %s105 = sphi 0, %s91
    %s109 = sphi 0, %s109
    %s111 = sphi 0, %s109
    %s112 = sphi 0, %s111
    %s126 = sphi 0, %s112
    %s130 = sphi 0, %s130
    %s132 = sphi 0, %s130
    %s133 = sphi 0, %s132
    %s147 = sphi 0, %s133
    %s153 = sphi 0, %s155
    %s156 = sphi 0, %s153
    %s157 = sphi 0, %s156
    %s173 = sphi 0, %s157
  $region4: #{resnet_block_forward.1} parent=0 // loop_header_branch
    %15 = sbr.rel (%p13) target = $region8
  $region5: #{resnet_block_forward.1} parent=0 // loop_body
    %s17 = ssub.s32 %s12, 1
    %s18 = ssub.s32 %s12, 2
    %s19 = sadd.s32 %s12, 1
    %s20 = ssub.s32 %s12, %s19
    %p21 = scmp.eq.s32.totalorder %s20, 0
    %s23 = sadd.s32 %s22, 1
    %s24 = scalar_select %p21, %s22, %s23
    %p27 = pneg %p21
    %p28 = scmp.eq.s32.totalorder %s12, 1
    %p29 = por %p27, %p28
    %p30 = scmp.ne.s32.totalorder %s22, %s25
    %p31 = scmp.eq.s32.totalorder %s12, 0
    %p32 = por %p30, %p31
    %p33 = scmp.ne.s32.totalorder %s22, %s25
    %p34 = scmp.eq.s32.totalorder %s17, 1
    %p35 = por %p33, %p34
    %p36 = scmp.ne.s32.totalorder %s25, %s26
    %p37 = scmp.eq.s32.totalorder %s17, 0
    %p38 = por %p36, %p37
    %p39 = scmp.ne.s32.totalorder %s25, %s26
    %p40 = scmp.eq.s32.totalorder %s18, 1
    %p41 = por %p39, %p40
    %p43 = scmp.ne.s32.totalorder %s26, %s42
    %p44 = scmp.eq.s32.totalorder %s18, 0
    %p45 = por %p43, %p44
    %s47 = sadd.s32 %s46, 1
    %p50 = scmp.eq.s32.totalorder %s12, 1
    %p51 = scmp.ne.s32.totalorder %s46, %s48
    %p52 = scmp.eq.s32.totalorder %s12, 0
    %p53 = por %p51, %p52
    %p54 = scmp.ne.s32.totalorder %s46, %s48
    %p55 = scmp.eq.s32.totalorder %s17, 1
    %p56 = por %p54, %p55
    %p57 = scmp.ne.s32.totalorder %s48, %s49
    %p58 = scmp.eq.s32.totalorder %s17, 0
    %p59 = por %p57, %p58
    %p60 = scmp.ne.s32.totalorder %s48, %s49
    %p61 = scmp.eq.s32.totalorder %s18, 1
    %p62 = por %p60, %p61
    %p64 = scmp.ne.s32.totalorder %s49, %s63
    %p65 = scmp.eq.s32.totalorder %s18, 0
    %p66 = por %p64, %p65
    %s68 = sadd.s32 %s67, 1
    %p71 = scmp.eq.s32.totalorder %s12, 1
    %p72 = scmp.ne.s32.totalorder %s67, %s69
    %p73 = scmp.eq.s32.totalorder %s12, 0
    %p74 = por %p72, %p73
    %p75 = scmp.ne.s32.totalorder %s67, %s69
    %p76 = scmp.eq.s32.totalorder %s17, 1
    %p77 = por %p75, %p76
    %p78 = scmp.ne.s32.totalorder %s69, %s70
    %p79 = scmp.eq.s32.totalorder %s17, 0
    %p80 = por %p78, %p79
    %p81 = scmp.ne.s32.totalorder %s69, %s70
    %p82 = scmp.eq.s32.totalorder %s18, 1
    %p83 = por %p81, %p82
    %p85 = scmp.ne.s32.totalorder %s70, %s84
    %p86 = scmp.eq.s32.totalorder %s18, 0
    %p87 = por %p85, %p86
    %s89 = sadd.s32 %s88, 1
    %p92 = scmp.eq.s32.totalorder %s12, 1
    %p93 = scmp.ne.s32.totalorder %s88, %s90
    %p94 = scmp.eq.s32.totalorder %s12, 0
    %p95 = por %p93, %p94
    %p96 = scmp.ne.s32.totalorder %s88, %s90
    %p97 = scmp.eq.s32.totalorder %s17, 1
    %p98 = por %p96, %p97
    %p99 = scmp.ne.s32.totalorder %s90, %s91
    %p100 = scmp.eq.s32.totalorder %s17, 0
    %p101 = por %p99, %p100
    %p102 = scmp.ne.s32.totalorder %s90, %s91
    %p103 = scmp.eq.s32.totalorder %s18, 1
    %p104 = por %p102, %p103
    %p106 = scmp.ne.s32.totalorder %s91, %s105
    %p107 = scmp.eq.s32.totalorder %s18, 0
    %p108 = por %p106, %p107
    %s110 = sadd.s32 %s109, 1
    %p113 = scmp.eq.s32.totalorder %s12, 1
    %p114 = scmp.ne.s32.totalorder %s109, %s111
    %p115 = scmp.eq.s32.totalorder %s12, 0
    %p116 = por %p114, %p115
    %p117 = scmp.ne.s32.totalorder %s109, %s111
    %p118 = scmp.eq.s32.totalorder %s17, 1
    %p119 = por %p117, %p118
    %p120 = scmp.ne.s32.totalorder %s111, %s112
    %p121 = scmp.eq.s32.totalorder %s17, 0
    %p122 = por %p120, %p121
    %p123 = scmp.ne.s32.totalorder %s111, %s112
    %p124 = scmp.eq.s32.totalorder %s18, 1
    %p125 = por %p123, %p124
    %p127 = scmp.ne.s32.totalorder %s112, %s126
    %p128 = scmp.eq.s32.totalorder %s18, 0
    %p129 = por %p127, %p128
    %s131 = sadd.s32 %s130, 1
    %p134 = scmp.eq.s32.totalorder %s12, 1
    %p135 = scmp.ne.s32.totalorder %s130, %s132
    %p136 = scmp.eq.s32.totalorder %s12, 0
    %p137 = por %p135, %p136
    %p138 = scmp.ne.s32.totalorder %s130, %s132
    %p139 = scmp.eq.s32.totalorder %s17, 1
    %p140 = por %p138, %p139
    %p141 = scmp.ne.s32.totalorder %s132, %s133
    %p142 = scmp.eq.s32.totalorder %s17, 0
    %p143 = por %p141, %p142
    %p144 = scmp.ne.s32.totalorder %s132, %s133
    %p145 = scmp.eq.s32.totalorder %s18, 1
    %p146 = por %p144, %p145
    %p148 = scmp.ne.s32.totalorder %s133, %s147
    %p149 = scmp.eq.s32.totalorder %s18, 0
    %p150 = por %p148, %p149
    %s151 = ssub.s32 %s12, %s19
    %p152 = scmp.eq.s32.totalorder %s151, 0
    %s154 = sadd.s32 %s153, 1
    %s155 = scalar_select %p152, %s153, %s154
    %p158 = pneg %p152
    %p159 = scmp.eq.s32.totalorder %s12, 1
    %p160 = por %p158, %p159
    %p161 = scmp.ne.s32.totalorder %s153, %s156
    %p162 = scmp.eq.s32.totalorder %s12, 0
    %p163 = por %p161, %p162
    %p164 = scmp.ne.s32.totalorder %s153, %s156
    %p165 = scmp.eq.s32.totalorder %s17, 1
    %p166 = por %p164, %p165
    %p167 = scmp.ne.s32.totalorder %s156, %s157
    %p168 = scmp.eq.s32.totalorder %s17, 0
    %p169 = por %p167, %p168
    %p170 = scmp.ne.s32.totalorder %s156, %s157
    %p171 = scmp.eq.s32.totalorder %s18, 1
    %p172 = por %p170, %p171
    %p174 = scmp.ne.s32.totalorder %s157, %s173
    %p175 = scmp.eq.s32.totalorder %s18, 0
    %p176 = por %p174, %p175
    %p177 = scmp.le.s32.totalorder 1, %s12
    %p178 = scmp.lt.s32.totalorder %s12, 3
    %p179 = pnand %p177, %p178
    %p180 = pneg %p179
    // Predicated region
    $region9: #{resnet_block_forward.1} parent=5 // pred_check
      _
    $region10: #{resnet_block_forward.1} parent=5 // pred_check_branch
      %182 = sbr.rel (%p179) target = $region12
    $region11: #{resnet_block_forward.1} parent=5 // pred_region
      %s183 = ssub.s32 %s12, 1
      // Predicated region
      $region13: #{resnet_block_forward.1} parent=11 // pred_check
        %p184 = pneg %p59
      $region14: #{resnet_block_forward.1} parent=11 // pred_check_branch
        %186 = sbr.rel (%p184) target = $region16
      $region15: #{resnet_block_forward.1} parent=11 // pred_region
        _
      $region16: #{resnet_block_forward.1} parent=11 // pred_fallthru
        _
      // Predicated region
      $region17: #{resnet_block_forward.1} parent=11 // pred_check
        %p187 = pneg %p80
      $region18: #{resnet_block_forward.1} parent=11 // pred_check_branch
        %189 = sbr.rel (%p187) target = $region20
      $region19: #{resnet_block_forward.1} parent=11 // pred_region
        _
      $region20: #{resnet_block_forward.1} parent=11 // pred_fallthru
        _
      // Predicated region
      $region21: #{resnet_block_forward.1} parent=11 // pred_check
        %p190 = pneg %p101
      $region22: #{resnet_block_forward.1} parent=11 // pred_check_branch
        %192 = sbr.rel (%p190) target = $region24
      $region23: #{resnet_block_forward.1} parent=11 // pred_region
        _
      $region24: #{resnet_block_forward.1} parent=11 // pred_fallthru
        _
      // Predicated region
      $region25: #{resnet_block_forward.1} parent=11 // pred_check
        %p193 = pneg %p122
      $region26: #{resnet_block_forward.1} parent=11 // pred_check_branch
        %195 = sbr.rel (%p193) target = $region28
      $region27: #{resnet_block_forward.1} parent=11 // pred_region
        _
      $region28: #{resnet_block_forward.1} parent=11 // pred_fallthru
        _
      // Predicated region
      $region29: #{resnet_block_forward.1} parent=11 // pred_check
        %p196 = pneg %p143
      $region30: #{resnet_block_forward.1} parent=11 // pred_check_branch
        %198 = sbr.rel (%p196) target = $region32
      $region31: #{resnet_block_forward.1} parent=11 // pred_region
        _
      $region32: #{resnet_block_forward.1} parent=11 // pred_fallthru
        _
    $region12: #{resnet_block_forward.1} parent=5 // pred_fallthru
      _
    %p199 = scmp.lt.s32.totalorder %s12, 2
    // Predicated region
    $region33: #{resnet_block_forward.1} parent=5 // pred_check
      %p200 = pneg %p199
    $region34: #{resnet_block_forward.1} parent=5 // pred_check_branch
      %202 = sbr.rel (%p200) target = $region36
    $region35: #{resnet_block_forward.1} parent=5 // pred_region
      // Predicated region
      $region37: #{resnet_block_forward.1} parent=35 // pred_check
        %p203 = pneg %p32
      $region38: #{resnet_block_forward.1} parent=35 // pred_check_branch
        %205 = sbr.rel (%p203) target = $region40
      $region39: #{resnet_block_forward.1} parent=35 // pred_region
        %p206 = scmp.lt.s32.totalorder %s12, 1
        %s207 = scalar_select %p206, %s12, 1
        %s208 = smul.addr %s207, 12
        %s209 = smul.addr %s208, 8
        %s210 = scalar_lea.vmem %s0, %s209
      $region40: #{resnet_block_forward.1} parent=35 // pred_fallthru
        _
    $region36: #{resnet_block_forward.1} parent=5 // pred_fallthru
      _
    %p211 = scmp.le.s32.totalorder 1, %s12
    %p212 = scmp.lt.s32.totalorder %s12, 3
    %p213 = pnand %p211, %p212
    %p214 = pneg %p213
    // Predicated region
    $region41: #{resnet_block_forward.1} parent=5 // pred_check
      _
    $region42: #{resnet_block_forward.1} parent=5 // pred_check_branch
      %216 = sbr.rel (%p213) target = $region44
    $region43: #{resnet_block_forward.1} parent=5 // pred_region
      %s217 = ssub.s32 %s12, 1
      %p218 = scmp.lt.s32.totalorder %s17, 1
      %s219 = scalar_select %p218, %s17, 1
      %s220 = smul.addr %s219, 12
      %s221 = smul.addr %s220, 8
      %s222 = scalar_lea.vmem %s0, %s221
      %p223 = pneg %p38
      %p224 = pneg %p35
      %p225 = pneg %p59
      %p226 = pneg %p56
      %p227 = pneg %p80
      %p228 = pneg %p77
      %p229 = pneg %p101
      %p230 = pneg %p98
      %p231 = pneg %p122
      %p232 = pneg %p119
      %p233 = pneg %p143
      %p234 = pneg %p140
      %p235 = pneg %p169
      %p236 = pneg %p166
      %p237 = scmp.lt.s32.totalorder %s17, 1
      %s238 = scalar_select %p237, %s17, 1
      %s239 = smul.addr %s238, 12
      %s240 = smul.addr %s239, 8
      %s241 = scalar_lea.vmem %s6, %s240
      %p242 = scmp.lt.s32.totalorder %s17, 1
      %s243 = scalar_select %p242, %s17, 1
      %s244 = smul.addr %s243, 12
      %s245 = smul.addr %s244, 8
      %s246 = scalar_lea.vmem %s0, %s245
      %p247 = scmp.lt.s32.totalorder %s17, 1
      %s248 = scalar_select %p247, %s17, 1
      %s249 = smul.addr %s248, 12
      %s250 = smul.addr %s249, 8
      %s251 = scalar_lea.vmem %s6, %s250
      %v253 = vld [vmem:[%s246] sm:$0xff]
      %v254 = vld [vmem:[%s246 + $0x8] sm:$0xff]
      %v255 = vld [vmem:[%s246 + $0x10] sm:$0xff]
      %v256 = vld [vmem:[%s246 + $0x18] sm:$0xff]
      %v257 = vld [vmem:[%s246 + $0x20] sm:$0xff]
      %v258 = vld [vmem:[%s246 + $0x28] sm:$0xff]
      %v259 = vld [vmem:[%s246 + $0x30] sm:$0xff]
      %v260 = vld [vmem:[%s246 + $0x38] sm:$0xff]
      %v261 = vld [vmem:[%s246 + $0x40] sm:$0xff]
      %v262 = vld [vmem:[%s246 + $0x48] sm:$0xff]
      %v263 = vld [vmem:[%s246 + $0x50] sm:$0xff]
      %v264 = vld [vmem:[%s246 + $0x58] sm:$0xff]
      %v265 = vld [vmem:[%s5] sm:$0x7]
      %v266 = vpack.c.bf16 %v254, %v253
      %v267 = vpack.c.bf16 %v255, %v255
      %v268 = vpack.c.bf16 %v257, %v256
      %v269 = vpack.c.bf16 %v258, %v258
      %v270 = vpack.c.bf16 %v260, %v259
      %v271 = vpack.c.bf16 %v261, %v261
      %v272 = vpack.c.bf16 %v263, %v262
      %v273 = vpack.c.bf16 %v264, %v264
      %v274 = vld [vmem:[%s1] sm:$0xf]
      %v275 = vld [vmem:[%s1 + $0x4] sm:$0xf]
      %v276 = vld [vmem:[%s1 + $0x8] sm:$0xf]
      %v277 = vld [vmem:[%s1 + $0xc] sm:$0xf]
      %s278 = scalar_lea.vmem %s1, 16
      %v279 = vld [vmem:[%s278] sm:$0xf]
      %v280 = vld [vmem:[%s278 + $0x4] sm:$0xf]
      %v281 = vld [vmem:[%s278 + $0x8] sm:$0xf]
      %v282 = vld [vmem:[%s278 + $0xc] sm:$0xf]
      %v287 = vunpack.c.l.b16 %v279
      %v288 = vunpack.c.l.b16 %v280
      %v289 = vunpack.c.l.b16 %v281
      %v290 = vunpack.c.l.b16 %v282
      %v291 = vpack.c.b16 %v288, %v287
      %v292 = vpack.c.b16 %v290, %v289
      %v301 = vunpack.c.l.b16 %v266
      %v302 = vunpack.c.h.b16 %v266
      %v303 = vunpack.c.l.b16 %v267
      %v304 = vunpack.c.l.b16 %v268
      %v305 = vunpack.c.h.b16 %v268
      %v306 = vunpack.c.l.b16 %v269
      %v307 = vunpack.c.l.b16 %v270
      %v308 = vunpack.c.h.b16 %v270
      %v309 = vunpack.c.l.b16 %v271
      %v310 = vunpack.c.l.b16 %v272
      %v311 = vunpack.c.h.b16 %v272
      %v312 = vunpack.c.l.b16 %v273
      %v313 = vpack.c.b16 %v304, %v301
      %v314 = vpack.c.b16 %v305, %v302
      %v315 = vpack.c.b16 %v306, %v303
      %v316 = vpack.c.b16 %v310, %v307
      %v317 = vpack.c.b16 %v311, %v308
      %v318 = vpack.c.b16 %v312, %v309
      %319 = vrot.lane.b32.xlu0 %v313, 127
      %v320 = vpop.permute.xlu0 %319
      %321 = vrot.lane.b32.xlu0 %v314, 127
      %v322 = vpop.permute.xlu0 %321
      %323 = vrot.lane.b32.xlu0 %v315, 127
      %v324 = vpop.permute.xlu0 %323
      %325 = vrot.lane.b32.xlu0 %v316, 127
      %v326 = vpop.permute.xlu0 %325
      %327 = vrot.lane.b32.xlu0 %v317, 127
      %v328 = vpop.permute.xlu0 %327
      %329 = vrot.lane.b32.xlu0 %v318, 127
      %v330 = vpop.permute.xlu0 %329
      %vm331 = vcmask 1039360
      %v332 = vsel %vm331, %v320, %v322
      %v333 = vsel %vm331, %v322, %v324
      %v334 = vsel %vm331, %v326, %v328
      %v335 = vsel %vm331, %v328, %v330
      %vm342 = vcmask 261120
      %v344 = vsel %vm342, %v291, 0
      %v347 = vsel %vm342, %v292, 0
      %349 = vmatpush.bf16.msra.mxu0 0
      %350 = vmatpush.bf16.msra.mxu0 0
      %351 = vmatpush.bf16.msra.mxu0 0
      %352 = vmatpush.bf16.msra.mxu0 0
      %353 = vmatpush.bf16.msra.mxu0 0
      %354 = vmatpush.bf16.msra.mxu0 0
      %355 = vmatpush.bf16.msra.mxu0 %v334
      %356 = vmatpush.bf16.msra.mxu0 %v332
      %357 = vmatmul.bf16.gmra.mxu0 %v344
      %v358 = vpop.f32.mrf.mxu0
      %v359 = vadd.f32 0.0, %v358
      %v360 = vpop.f32.mrf.mxu0
      %v361 = vadd.f32 0.0, %v360
      %362 = vmatmul.bf16.gmra.mxu0 %v347
      %v363 = vpop.f32.mrf.mxu0
      %v364 = vadd.f32 0.0, %v363
      %v365 = vpop.f32.mrf.mxu0
      %v366 = vadd.f32 0.0, %v365
      %367 = vdwg.mxu0
      %368 = vmatpush.bf16.msra.mxu0 0
      %369 = vmatpush.bf16.msra.mxu0 0
      %370 = vmatpush.bf16.msra.mxu0 0
      %371 = vmatpush.bf16.msra.mxu0 0
      %372 = vmatpush.bf16.msra.mxu0 0
      %373 = vmatpush.bf16.msra.mxu0 0
      %374 = vmatpush.bf16.msra.mxu0 %v335
      %375 = vmatpush.bf16.msra.mxu0 %v333
      %376 = vmatmul.bf16.gmra.mxu0 %v344
      %v377 = vpop.f32.mrf.mxu0
      %v378 = vadd.f32 0.0, %v377
      %v379 = vpop.f32.mrf.mxu0
      %v380 = vadd.f32 0.0, %v379
      %381 = vmatmul.bf16.gmra.mxu0 %v347
      %v382 = vpop.f32.mrf.mxu0
      %v383 = vadd.f32 0.0, %v382
      %v384 = vpop.f32.mrf.mxu0
      %v385 = vadd.f32 0.0, %v384
      %386 = vdwg.mxu0
      %387 = vmatpush.bf16.msra.mxu0 0
      %388 = vmatpush.bf16.msra.mxu0 0
      %389 = vmatpush.bf16.msra.mxu0 0
      %390 = vmatpush.bf16.msra.mxu0 0
      %391 = vmatpush.bf16.msra.mxu0 0
      %392 = vmatpush.bf16.msra.mxu0 0
      %393 = vmatpush.bf16.msra.mxu0 %v330
      %394 = vmatpush.bf16.msra.mxu0 %v324
      %395 = vmatmul.bf16.gmra.mxu0 %v344
      %v396 = vpop.f32.mrf.mxu0
      %v397 = vadd.f32 0.0, %v396
      %v398 = vpop.f32.mrf.mxu0
      %v399 = vadd.f32 0.0, %v398
      %400 = vmatmul.bf16.gmra.mxu0 %v347
      %v401 = vpop.f32.mrf.mxu0
      %v402 = vadd.f32 0.0, %v401
      %v403 = vpop.f32.mrf.mxu0
      %v404 = vadd.f32 0.0, %v403
      %405 = vdwg.mxu0
      %v410 = vunpack.c.l.b16 %v274
      %v411 = vunpack.c.l.b16 %v275
      %v412 = vunpack.c.l.b16 %v276
      %v413 = vunpack.c.l.b16 %v277
      %v414 = vpack.c.b16 %v411, %v410
      %v415 = vpack.c.b16 %v413, %v412
      %v423 = vsel %vm342, %v414, 0
      %v426 = vsel %vm342, %v415, 0
      %428 = vmatpush.bf16.msra.mxu0 0
      %429 = vmatpush.bf16.msra.mxu0 0
      %430 = vmatpush.bf16.msra.mxu0 0
      %431 = vmatpush.bf16.msra.mxu0 0
      %432 = vmatpush.bf16.msra.mxu0 0
      %433 = vmatpush.bf16.msra.mxu0 0
      %434 = vmatpush.bf16.msra.mxu0 %v316
      %435 = vmatpush.bf16.msra.mxu0 %v313
      %436 = vmatmul.bf16.gmra.mxu0 %v423
      %v437 = vpop.f32.mrf.mxu0
      %v438 = vadd.f32 %v359, %v437
      %v439 = vpop.f32.mrf.mxu0
      %v440 = vadd.f32 %v361, %v439
      %441 = vmatmul.bf16.gmra.mxu0 %v426
      %v442 = vpop.f32.mrf.mxu0
      %v443 = vadd.f32 %v364, %v442
      %v444 = vpop.f32.mrf.mxu0
      %v445 = vadd.f32 %v366, %v444
      %446 = vdwg.mxu0
      %447 = vmatpush.bf16.msra.mxu0 0
      %448 = vmatpush.bf16.msra.mxu0 0
      %449 = vmatpush.bf16.msra.mxu0 0
      %450 = vmatpush.bf16.msra.mxu0 0
      %451 = vmatpush.bf16.msra.mxu0 0
      %452 = vmatpush.bf16.msra.mxu0 0
      %453 = vmatpush.bf16.msra.mxu0 %v317
      %454 = vmatpush.bf16.msra.mxu0 %v314
      %455 = vmatmul.bf16.gmra.mxu0 %v423
      %v456 = vpop.f32.mrf.mxu0
      %v457 = vadd.f32 %v378, %v456
      %v458 = vpop.f32.mrf.mxu0
      %v459 = vadd.f32 %v380, %v458
      %460 = vmatmul.bf16.gmra.mxu0 %v426
      %v461 = vpop.f32.mrf.mxu0
      %v462 = vadd.f32 %v383, %v461
      %v463 = vpop.f32.mrf.mxu0
      %v464 = vadd.f32 %v385, %v463
      %465 = vdwg.mxu0
      %466 = vmatpush.bf16.msra.mxu0 0
      %467 = vmatpush.bf16.msra.mxu0 0
      %468 = vmatpush.bf16.msra.mxu0 0
      %469 = vmatpush.bf16.msra.mxu0 0
      %470 = vmatpush.bf16.msra.mxu0 0
      %471 = vmatpush.bf16.msra.mxu0 0
      %472 = vmatpush.bf16.msra.mxu0 %v318
      %473 = vmatpush.bf16.msra.mxu0 %v315
      %474 = vmatmul.bf16.gmra.mxu0 %v423
      %v475 = vpop.f32.mrf.mxu0
      %v476 = vadd.f32 %v397, %v475
      %v477 = vpop.f32.mrf.mxu0
      %v478 = vadd.f32 %v399, %v477
      %479 = vmatmul.bf16.gmra.mxu0 %v426
      %v480 = vpop.f32.mrf.mxu0
      %v481 = vadd.f32 %v402, %v480
      %v482 = vpop.f32.mrf.mxu0
      %v483 = vadd.f32 %v404, %v482
      %484 = vdwg.mxu0
      %s485 = scalar_lea.vmem %s1, 32
      %v486 = vld [vmem:[%s485] sm:$0xf]
      %v487 = vld [vmem:[%s485 + $0x4] sm:$0xf]
      %v488 = vld [vmem:[%s485 + $0x8] sm:$0xf]
      %v489 = vld [vmem:[%s485 + $0xc] sm:$0xf]
      %v494 = vunpack.c.l.b16 %v486
      %v495 = vunpack.c.l.b16 %v487
      %v496 = vunpack.c.l.b16 %v488
      %v497 = vunpack.c.l.b16 %v489
      %v498 = vpack.c.b16 %v495, %v494
      %v499 = vpack.c.b16 %v497, %v496
      %500 = vrot.lane.b32.xlu0 %v313, 126
      %v501 = vpop.permute.xlu0 %500
      %502 = vrot.lane.b32.xlu0 %v314, 126
      %v503 = vpop.permute.xlu0 %502
      %504 = vrot.lane.b32.xlu0 %v315, 126
      %v505 = vpop.permute.xlu0 %504
      %506 = vrot.lane.b32.xlu0 %v316, 126
      %v507 = vpop.permute.xlu0 %506
      %508 = vrot.lane.b32.xlu0 %v317, 126
      %v509 = vpop.permute.xlu0 %508
      %510 = vrot.lane.b32.xlu0 %v318, 126
      %v511 = vpop.permute.xlu0 %510
      %vm512 = vcmask 1031168
      %v513 = vsel %vm512, %v501, %v503
      %v514 = vsel %vm512, %v503, %v505
      %v515 = vsel %vm512, %v507, %v509
      %v516 = vsel %vm512, %v509, %v511
      %v524 = vsel %vm342, %v498, 0
      %v527 = vsel %vm342, %v499, 0
      %529 = vmatpush.bf16.msra.mxu0 0
      %530 = vmatpush.bf16.msra.mxu0 0
      %531 = vmatpush.bf16.msra.mxu0 0
      %532 = vmatpush.bf16.msra.mxu0 0
      %533 = vmatpush.bf16.msra.mxu0 0
      %534 = vmatpush.bf16.msra.mxu0 0
      %535 = vmatpush.bf16.msra.mxu0 %v515
      %536 = vmatpush.bf16.msra.mxu0 %v513
      %537 = vmatmul.bf16.gmra.mxu0 %v524
      %v538 = vpop.f32.mrf.mxu0
      %v539 = vadd.f32 0.0, %v538
      %v540 = vpop.f32.mrf.mxu0
      %v541 = vadd.f32 0.0, %v540
      %542 = vmatmul.bf16.gmra.mxu0 %v527
      %v543 = vpop.f32.mrf.mxu0
      %v544 = vadd.f32 0.0, %v543
      %v545 = vpop.f32.mrf.mxu0
      %v546 = vadd.f32 0.0, %v545
      %547 = vdwg.mxu0
      %548 = vmatpush.bf16.msra.mxu0 0
      %549 = vmatpush.bf16.msra.mxu0 0
      %550 = vmatpush.bf16.msra.mxu0 0
      %551 = vmatpush.bf16.msra.mxu0 0
      %552 = vmatpush.bf16.msra.mxu0 0
      %553 = vmatpush.bf16.msra.mxu0 0
      %554 = vmatpush.bf16.msra.mxu0 %v516
      %555 = vmatpush.bf16.msra.mxu0 %v514
      %556 = vmatmul.bf16.gmra.mxu0 %v524
      %v557 = vpop.f32.mrf.mxu0
      %v558 = vadd.f32 0.0, %v557
      %v559 = vpop.f32.mrf.mxu0
      %v560 = vadd.f32 0.0, %v559
      %561 = vmatmul.bf16.gmra.mxu0 %v527
      %v562 = vpop.f32.mrf.mxu0
      %v563 = vadd.f32 0.0, %v562
      %v564 = vpop.f32.mrf.mxu0
      %v565 = vadd.f32 0.0, %v564
      %566 = vdwg.mxu0
      %567 = vmatpush.bf16.msra.mxu0 0
      %568 = vmatpush.bf16.msra.mxu0 0
      %569 = vmatpush.bf16.msra.mxu0 0
      %570 = vmatpush.bf16.msra.mxu0 0
      %571 = vmatpush.bf16.msra.mxu0 0
      %572 = vmatpush.bf16.msra.mxu0 0
      %573 = vmatpush.bf16.msra.mxu0 %v511
      %574 = vmatpush.bf16.msra.mxu0 %v505
      %575 = vmatmul.bf16.gmra.mxu0 %v524
      %v576 = vpop.f32.mrf.mxu0
      %v577 = vadd.f32 0.0, %v576
      %v578 = vpop.f32.mrf.mxu0
      %v579 = vadd.f32 0.0, %v578
      %580 = vmatmul.bf16.gmra.mxu0 %v527
      %v581 = vpop.f32.mrf.mxu0
      %v582 = vadd.f32 0.0, %v581
      %v583 = vpop.f32.mrf.mxu0
      %v584 = vadd.f32 0.0, %v583
      %585 = vdwg.mxu0
      %v586 = vadd.f32 %v438, %v539
      %v587 = vadd.f32 %v457, %v558
      %v588 = vadd.f32 %v476, %v577
      %v589 = vadd.f32 %v440, %v541
      %v590 = vadd.f32 %v459, %v560
      %v591 = vadd.f32 %v478, %v579
      %v592 = vadd.f32 %v443, %v544
      %v593 = vadd.f32 %v462, %v563
      %v594 = vadd.f32 %v481, %v582
      %v595 = vadd.f32 %v445, %v546
      %v596 = vadd.f32 %v464, %v565
      %v597 = vadd.f32 %v483, %v584
      %s598 = scalar_lea.vmem %s1, 48
      %v599 = vld [vmem:[%s598] sm:$0xf]
      %v600 = vld [vmem:[%s598 + $0x4] sm:$0xf]
      %v601 = vld [vmem:[%s598 + $0x8] sm:$0xf]
      %v602 = vld [vmem:[%s598 + $0xc] sm:$0xf]
      %v607 = vunpack.c.l.b16 %v599
      %v608 = vunpack.c.l.b16 %v600
      %v609 = vunpack.c.l.b16 %v601
      %v610 = vunpack.c.l.b16 %v602
      %v611 = vpack.c.b16 %v608, %v607
      %v612 = vpack.c.b16 %v610, %v609
      %613 = vrot.lane.b32.xlu0 %v313, 110
      %v614 = vpop.permute.xlu0 %613
      %615 = vrot.lane.b32.xlu0 %v314, 110
      %v616 = vpop.permute.xlu0 %615
      %617 = vrot.lane.b32.xlu0 %v315, 110
      %v618 = vpop.permute.xlu0 %617
      %619 = vrot.lane.b32.xlu0 %v316, 110
      %v620 = vpop.permute.xlu0 %619
      %621 = vrot.lane.b32.xlu0 %v317, 110
      %v622 = vpop.permute.xlu0 %621
      %623 = vrot.lane.b32.xlu0 %v318, 110
      %v624 = vpop.permute.xlu0 %623
      %vm625 = vcmask 900096
      %v626 = vsel %vm625, %v614, %v616
      %v627 = vsel %vm625, %v616, %v618
      %v628 = vsel %vm625, %v620, %v622
      %v629 = vsel %vm625, %v622, %v624
      %v637 = vsel %vm342, %v611, 0
      %v640 = vsel %vm342, %v612, 0
      %642 = vmatpush.bf16.msra.mxu0 0
      %643 = vmatpush.bf16.msra.mxu0 0
      %644 = vmatpush.bf16.msra.mxu0 0
      %645 = vmatpush.bf16.msra.mxu0 0
      %646 = vmatpush.bf16.msra.mxu0 0
      %647 = vmatpush.bf16.msra.mxu0 0
      %648 = vmatpush.bf16.msra.mxu0 %v628
      %649 = vmatpush.bf16.msra.mxu0 %v626
      %650 = vmatmul.bf16.gmra.mxu0 %v637
      %v651 = vpop.f32.mrf.mxu0
      %v652 = vadd.f32 0.0, %v651
      %v653 = vpop.f32.mrf.mxu0
      %v654 = vadd.f32 0.0, %v653
      %655 = vmatmul.bf16.gmra.mxu0 %v640
      %v656 = vpop.f32.mrf.mxu0
      %v657 = vadd.f32 0.0, %v656
      %v658 = vpop.f32.mrf.mxu0
      %v659 = vadd.f32 0.0, %v658
      %660 = vdwg.mxu0
      %661 = vmatpush.bf16.msra.mxu0 0
      %662 = vmatpush.bf16.msra.mxu0 0
      %663 = vmatpush.bf16.msra.mxu0 0
      %664 = vmatpush.bf16.msra.mxu0 0
      %665 = vmatpush.bf16.msra.mxu0 0
      %666 = vmatpush.bf16.msra.mxu0 0
      %667 = vmatpush.bf16.msra.mxu0 %v629
      %668 = vmatpush.bf16.msra.mxu0 %v627
      %669 = vmatmul.bf16.gmra.mxu0 %v637
      %v670 = vpop.f32.mrf.mxu0
      %v671 = vadd.f32 0.0, %v670
      %v672 = vpop.f32.mrf.mxu0
      %v673 = vadd.f32 0.0, %v672
      %674 = vmatmul.bf16.gmra.mxu0 %v640
      %v675 = vpop.f32.mrf.mxu0
      %v676 = vadd.f32 0.0, %v675
      %v677 = vpop.f32.mrf.mxu0
      %v678 = vadd.f32 0.0, %v677
      %679 = vdwg.mxu0
      %680 = vmatpush.bf16.msra.mxu0 0
      %681 = vmatpush.bf16.msra.mxu0 0
      %682 = vmatpush.bf16.msra.mxu0 0
      %683 = vmatpush.bf16.msra.mxu0 0
      %684 = vmatpush.bf16.msra.mxu0 0
      %685 = vmatpush.bf16.msra.mxu0 0
      %686 = vmatpush.bf16.msra.mxu0 %v624
      %687 = vmatpush.bf16.msra.mxu0 %v618
      %688 = vmatmul.bf16.gmra.mxu0 %v637
      %v689 = vpop.f32.mrf.mxu0
      %v690 = vadd.f32 0.0, %v689
      %v691 = vpop.f32.mrf.mxu0
      %v692 = vadd.f32 0.0, %v691
      %693 = vmatmul.bf16.gmra.mxu0 %v640
      %v694 = vpop.f32.mrf.mxu0
      %v695 = vadd.f32 0.0, %v694
      %v696 = vpop.f32.mrf.mxu0
      %v697 = vadd.f32 0.0, %v696
      %698 = vdwg.mxu0
      %v699 = vadd.f32 %v586, %v652
      %v700 = vadd.f32 %v587, %v671
      %v701 = vadd.f32 %v588, %v690
      %v702 = vadd.f32 %v589, %v654
      %v703 = vadd.f32 %v590, %v673
      %v704 = vadd.f32 %v591, %v692
      %v705 = vadd.f32 %v592, %v657
      %v706 = vadd.f32 %v593, %v676
      %v707 = vadd.f32 %v594, %v695
      %v708 = vadd.f32 %v595, %v659
      %v709 = vadd.f32 %v596, %v678
      %v710 = vadd.f32 %v597, %v697
      %s711 = scalar_lea.vmem %s1, 64
      %v712 = vld [vmem:[%s711] sm:$0xf]
      %v713 = vld [vmem:[%s711 + $0x4] sm:$0xf]
      %v714 = vld [vmem:[%s711 + $0x8] sm:$0xf]
      %v715 = vld [vmem:[%s711 + $0xc] sm:$0xf]
      %v720 = vunpack.c.l.b16 %v712
      %v721 = vunpack.c.l.b16 %v713
      %v722 = vunpack.c.l.b16 %v714
      %v723 = vunpack.c.l.b16 %v715
      %v724 = vpack.c.b16 %v721, %v720
      %v725 = vpack.c.b16 %v723, %v722
      %726 = vrot.lane.b32.xlu0 %v313, 109
      %v727 = vpop.permute.xlu0 %726
      %728 = vrot.lane.b32.xlu0 %v314, 109
      %v729 = vpop.permute.xlu0 %728
      %730 = vrot.lane.b32.xlu0 %v315, 109
      %v731 = vpop.permute.xlu0 %730
      %732 = vrot.lane.b32.xlu0 %v316, 109
      %v733 = vpop.permute.xlu0 %732
      %734 = vrot.lane.b32.xlu0 %v317, 109
      %v735 = vpop.permute.xlu0 %734
      %736 = vrot.lane.b32.xlu0 %v318, 109
      %v737 = vpop.permute.xlu0 %736
      %vm738 = vcmask 891904
      %v739 = vsel %vm738, %v727, %v729
      %v740 = vsel %vm738, %v729, %v731
      %v741 = vsel %vm738, %v733, %v735
      %v742 = vsel %vm738, %v735, %v737
      %v750 = vsel %vm342, %v724, 0
      %v753 = vsel %vm342, %v725, 0
      %755 = vmatpush.bf16.msra.mxu0 0
      %756 = vmatpush.bf16.msra.mxu0 0
      %757 = vmatpush.bf16.msra.mxu0 0
      %758 = vmatpush.bf16.msra.mxu0 0
      %759 = vmatpush.bf16.msra.mxu0 0
      %760 = vmatpush.bf16.msra.mxu0 0
      %761 = vmatpush.bf16.msra.mxu0 %v741
      %762 = vmatpush.bf16.msra.mxu0 %v739
      %763 = vmatmul.bf16.gmra.mxu0 %v750
      %v764 = vpop.f32.mrf.mxu0
      %v765 = vadd.f32 0.0, %v764
      %v766 = vpop.f32.mrf.mxu0
      %v767 = vadd.f32 0.0, %v766
      %768 = vmatmul.bf16.gmra.mxu0 %v753
      %v769 = vpop.f32.mrf.mxu0
      %v770 = vadd.f32 0.0, %v769
      %v771 = vpop.f32.mrf.mxu0
      %v772 = vadd.f32 0.0, %v771
      %773 = vdwg.mxu0
      %774 = vmatpush.bf16.msra.mxu0 0
      %775 = vmatpush.bf16.msra.mxu0 0
      %776 = vmatpush.bf16.msra.mxu0 0
      %777 = vmatpush.bf16.msra.mxu0 0
      %778 = vmatpush.bf16.msra.mxu0 0
      %779 = vmatpush.bf16.msra.mxu0 0
      %780 = vmatpush.bf16.msra.mxu0 %v742
      %781 = vmatpush.bf16.msra.mxu0 %v740
      %782 = vmatmul.bf16.gmra.mxu0 %v750
      %v783 = vpop.f32.mrf.mxu0
      %v784 = vadd.f32 0.0, %v783
      %v785 = vpop.f32.mrf.mxu0
      %v786 = vadd.f32 0.0, %v785
      %787 = vmatmul.bf16.gmra.mxu0 %v753
      %v788 = vpop.f32.mrf.mxu0
      %v789 = vadd.f32 0.0, %v788
      %v790 = vpop.f32.mrf.mxu0
      %v791 = vadd.f32 0.0, %v790
      %792 = vdwg.mxu0
      %793 = vmatpush.bf16.msra.mxu0 0
      %794 = vmatpush.bf16.msra.mxu0 0
      %795 = vmatpush.bf16.msra.mxu0 0
      %796 = vmatpush.bf16.msra.mxu0 0
      %797 = vmatpush.bf16.msra.mxu0 0
      %798 = vmatpush.bf16.msra.mxu0 0
      %799 = vmatpush.bf16.msra.mxu0 %v737
      %800 = vmatpush.bf16.msra.mxu0 %v731
      %801 = vmatmul.bf16.gmra.mxu0 %v750
      %v802 = vpop.f32.mrf.mxu0
      %v803 = vadd.f32 0.0, %v802
      %v804 = vpop.f32.mrf.mxu0
      %v805 = vadd.f32 0.0, %v804
      %806 = vmatmul.bf16.gmra.mxu0 %v753
      %v807 = vpop.f32.mrf.mxu0
      %v808 = vadd.f32 0.0, %v807
      %v809 = vpop.f32.mrf.mxu0
      %v810 = vadd.f32 0.0, %v809
      %811 = vdwg.mxu0
      %v812 = vadd.f32 %v699, %v765
      %v813 = vadd.f32 %v700, %v784
      %v814 = vadd.f32 %v701, %v803
      %v815 = vadd.f32 %v702, %v767
      %v816 = vadd.f32 %v703, %v786
      %v817 = vadd.f32 %v704, %v805
      %v818 = vadd.f32 %v705, %v770
      %v819 = vadd.f32 %v706, %v789
      %v820 = vadd.f32 %v707, %v808
      %v821 = vadd.f32 %v708, %v772
      %v822 = vadd.f32 %v709, %v791
      %v823 = vadd.f32 %v710, %v810
      %s824 = scalar_lea.vmem %s1, 80
      %v825 = vld [vmem:[%s824] sm:$0xf]
      %v826 = vld [vmem:[%s824 + $0x4] sm:$0xf]
      %v827 = vld [vmem:[%s824 + $0x8] sm:$0xf]
      %v828 = vld [vmem:[%s824 + $0xc] sm:$0xf]
      %v833 = vunpack.c.l.b16 %v825
      %v834 = vunpack.c.l.b16 %v826
      %v835 = vunpack.c.l.b16 %v827
      %v836 = vunpack.c.l.b16 %v828
      %v837 = vpack.c.b16 %v834, %v833
      %v838 = vpack.c.b16 %v836, %v835
      %839 = vrot.lane.b32.xlu0 %v313, 108
      %v840 = vpop.permute.xlu0 %839
      %841 = vrot.lane.b32.xlu0 %v314, 108
      %v842 = vpop.permute.xlu0 %841
      %843 = vrot.lane.b32.xlu0 %v315, 108
      %v844 = vpop.permute.xlu0 %843
      %845 = vrot.lane.b32.xlu0 %v316, 108
      %v846 = vpop.permute.xlu0 %845
      %847 = vrot.lane.b32.xlu0 %v317, 108
      %v848 = vpop.permute.xlu0 %847
      %849 = vrot.lane.b32.xlu0 %v318, 108
      %v850 = vpop.permute.xlu0 %849
      %vm851 = vcmask 883712
      %v852 = vsel %vm851, %v840, %v842
      %v853 = vsel %vm851, %v842, %v844
      %v854 = vsel %vm851, %v846, %v848
      %v855 = vsel %vm851, %v848, %v850
      %v863 = vsel %vm342, %v837, 0
      %v866 = vsel %vm342, %v838, 0
      %868 = vmatpush.bf16.msra.mxu0 0
      %869 = vmatpush.bf16.msra.mxu0 0
      %870 = vmatpush.bf16.msra.mxu0 0
      %871 = vmatpush.bf16.msra.mxu0 0
      %872 = vmatpush.bf16.msra.mxu0 0
      %873 = vmatpush.bf16.msra.mxu0 0
      %874 = vmatpush.bf16.msra.mxu0 %v854
      %875 = vmatpush.bf16.msra.mxu0 %v852
      %876 = vmatmul.bf16.gmra.mxu0 %v863
      %v877 = vpop.f32.mrf.mxu0
      %v878 = vadd.f32 0.0, %v877
      %v879 = vpop.f32.mrf.mxu0
      %v880 = vadd.f32 0.0, %v879
      %881 = vmatmul.bf16.gmra.mxu0 %v866
      %v882 = vpop.f32.mrf.mxu0
      %v883 = vadd.f32 0.0, %v882
      %v884 = vpop.f32.mrf.mxu0
      %v885 = vadd.f32 0.0, %v884
      %886 = vdwg.mxu0
      %887 = vmatpush.bf16.msra.mxu0 0
      %888 = vmatpush.bf16.msra.mxu0 0
      %889 = vmatpush.bf16.msra.mxu0 0
      %890 = vmatpush.bf16.msra.mxu0 0
      %891 = vmatpush.bf16.msra.mxu0 0
      %892 = vmatpush.bf16.msra.mxu0 0
      %893 = vmatpush.bf16.msra.mxu0 %v855
      %894 = vmatpush.bf16.msra.mxu0 %v853
      %895 = vmatmul.bf16.gmra.mxu0 %v863
      %v896 = vpop.f32.mrf.mxu0
      %v897 = vadd.f32 0.0, %v896
      %v898 = vpop.f32.mrf.mxu0
      %v899 = vadd.f32 0.0, %v898
      %900 = vmatmul.bf16.gmra.mxu0 %v866
      %v901 = vpop.f32.mrf.mxu0
      %v902 = vadd.f32 0.0, %v901
      %v903 = vpop.f32.mrf.mxu0
      %v904 = vadd.f32 0.0, %v903
      %905 = vdwg.mxu0
      %906 = vmatpush.bf16.msra.mxu0 0
      %907 = vmatpush.bf16.msra.mxu0 0
      %908 = vmatpush.bf16.msra.mxu0 0
      %909 = vmatpush.bf16.msra.mxu0 0
      %910 = vmatpush.bf16.msra.mxu0 0
      %911 = vmatpush.bf16.msra.mxu0 0
      %912 = vmatpush.bf16.msra.mxu0 %v850
      %913 = vmatpush.bf16.msra.mxu0 %v844
      %914 = vmatmul.bf16.gmra.mxu0 %v863
      %v915 = vpop.f32.mrf.mxu0
      %v916 = vadd.f32 0.0, %v915
      %v917 = vpop.f32.mrf.mxu0
      %v918 = vadd.f32 0.0, %v917
      %919 = vmatmul.bf16.gmra.mxu0 %v866
      %v920 = vpop.f32.mrf.mxu0
      %v921 = vadd.f32 0.0, %v920
      %v922 = vpop.f32.mrf.mxu0
      %v923 = vadd.f32 0.0, %v922
      %924 = vdwg.mxu0
      %v925 = vadd.f32 %v812, %v878
      %v926 = vadd.f32 %v813, %v897
      %v927 = vadd.f32 %v814, %v916
      %v928 = vadd.f32 %v815, %v880
      %v929 = vadd.f32 %v816, %v899
      %v930 = vadd.f32 %v817, %v918
      %v931 = vadd.f32 %v818, %v883
      %v932 = vadd.f32 %v819, %v902
      %v933 = vadd.f32 %v820, %v921
      %v934 = vadd.f32 %v821, %v885
      %v935 = vadd.f32 %v822, %v904
      %v936 = vadd.f32 %v823, %v923
      %s937 = scalar_lea.vmem %s1, 96
      %v938 = vld [vmem:[%s937] sm:$0xf]
      %v939 = vld [vmem:[%s937 + $0x4] sm:$0xf]
      %v940 = vld [vmem:[%s937 + $0x8] sm:$0xf]
      %v941 = vld [vmem:[%s937 + $0xc] sm:$0xf]
      %v946 = vunpack.c.l.b16 %v938
      %v947 = vunpack.c.l.b16 %v939
      %v948 = vunpack.c.l.b16 %v940
      %v949 = vunpack.c.l.b16 %v941
      %v950 = vpack.c.b16 %v947, %v946
      %v951 = vpack.c.b16 %v949, %v948
      %952 = vrot.lane.b32.xlu0 %v313, 92
      %v953 = vpop.permute.xlu0 %952
      %954 = vrot.lane.b32.xlu0 %v314, 92
      %v955 = vpop.permute.xlu0 %954
      %956 = vrot.lane.b32.xlu0 %v315, 92
      %v957 = vpop.permute.xlu0 %956
      %958 = vrot.lane.b32.xlu0 %v316, 92
      %v959 = vpop.permute.xlu0 %958
      %960 = vrot.lane.b32.xlu0 %v317, 92
      %v961 = vpop.permute.xlu0 %960
      %962 = vrot.lane.b32.xlu0 %v318, 92
      %v963 = vpop.permute.xlu0 %962
      %vm964 = vcmask 752640
      %v965 = vsel %vm964, %v953, %v955
      %v966 = vsel %vm964, %v955, %v957
      %v967 = vsel %vm964, %v959, %v961
      %v968 = vsel %vm964, %v961, %v963
      %v976 = vsel %vm342, %v950, 0
      %v979 = vsel %vm342, %v951, 0
      %981 = vmatpush.bf16.msra.mxu0 0
      %982 = vmatpush.bf16.msra.mxu0 0
      %983 = vmatpush.bf16.msra.mxu0 0
      %984 = vmatpush.bf16.msra.mxu0 0
      %985 = vmatpush.bf16.msra.mxu0 0
      %986 = vmatpush.bf16.msra.mxu0 0
      %987 = vmatpush.bf16.msra.mxu0 %v967
      %988 = vmatpush.bf16.msra.mxu0 %v965
      %989 = vmatmul.bf16.gmra.mxu0 %v976
      %v990 = vpop.f32.mrf.mxu0
      %v991 = vadd.f32 0.0, %v990
      %v992 = vpop.f32.mrf.mxu0
      %v993 = vadd.f32 0.0, %v992
      %994 = vmatmul.bf16.gmra.mxu0 %v979
      %v995 = vpop.f32.mrf.mxu0
      %v996 = vadd.f32 0.0, %v995
      %v997 = vpop.f32.mrf.mxu0
      %v998 = vadd.f32 0.0, %v997
      %999 = vdwg.mxu0
      %1000 = vmatpush.bf16.msra.mxu0 0
      %1001 = vmatpush.bf16.msra.mxu0 0
      %1002 = vmatpush.bf16.msra.mxu0 0
      %1003 = vmatpush.bf16.msra.mxu0 0
      %1004 = vmatpush.bf16.msra.mxu0 0
      %1005 = vmatpush.bf16.msra.mxu0 0
      %1006 = vmatpush.bf16.msra.mxu0 %v968
      %1007 = vmatpush.bf16.msra.mxu0 %v966
      %1008 = vmatmul.bf16.gmra.mxu0 %v976
      %v1009 = vpop.f32.mrf.mxu0
      %v1010 = vadd.f32 0.0, %v1009
      %v1011 = vpop.f32.mrf.mxu0
      %v1012 = vadd.f32 0.0, %v1011
      %1013 = vmatmul.bf16.gmra.mxu0 %v979
      %v1014 = vpop.f32.mrf.mxu0
      %v1015 = vadd.f32 0.0, %v1014
      %v1016 = vpop.f32.mrf.mxu0
      %v1017 = vadd.f32 0.0, %v1016
      %1018 = vdwg.mxu0
      %1019 = vmatpush.bf16.msra.mxu0 0
      %1020 = vmatpush.bf16.msra.mxu0 0
      %1021 = vmatpush.bf16.msra.mxu0 0
      %1022 = vmatpush.bf16.msra.mxu0 0
      %1023 = vmatpush.bf16.msra.mxu0 0
      %1024 = vmatpush.bf16.msra.mxu0 0
      %1025 = vmatpush.bf16.msra.mxu0 %v963
      %1026 = vmatpush.bf16.msra.mxu0 %v957
      %1027 = vmatmul.bf16.gmra.mxu0 %v976
      %v1028 = vpop.f32.mrf.mxu0
      %v1029 = vadd.f32 0.0, %v1028
      %v1030 = vpop.f32.mrf.mxu0
      %v1031 = vadd.f32 0.0, %v1030
      %1032 = vmatmul.bf16.gmra.mxu0 %v979
      %v1033 = vpop.f32.mrf.mxu0
      %v1034 = vadd.f32 0.0, %v1033
      %v1035 = vpop.f32.mrf.mxu0
      %v1036 = vadd.f32 0.0, %v1035
      %1037 = vdwg.mxu0
      %v1038 = vadd.f32 %v925, %v991
      %v1039 = vadd.f32 %v926, %v1010
      %v1040 = vadd.f32 %v927, %v1029
      %v1041 = vadd.f32 %v928, %v993
      %v1042 = vadd.f32 %v929, %v1012
      %v1043 = vadd.f32 %v930, %v1031
      %v1044 = vadd.f32 %v931, %v996
      %v1045 = vadd.f32 %v932, %v1015
      %v1046 = vadd.f32 %v933, %v1034
      %v1047 = vadd.f32 %v934, %v998
      %v1048 = vadd.f32 %v935, %v1017
      %v1049 = vadd.f32 %v936, %v1036
      %s1050 = scalar_lea.vmem %s1, 112
      %v1051 = vld [vmem:[%s1050] sm:$0xf]
      %v1052 = vld [vmem:[%s1050 + $0x4] sm:$0xf]
      %v1053 = vld [vmem:[%s1050 + $0x8] sm:$0xf]
      %v1054 = vld [vmem:[%s1050 + $0xc] sm:$0xf]
      %v1059 = vunpack.c.l.b16 %v1051
      %v1060 = vunpack.c.l.b16 %v1052
      %v1061 = vunpack.c.l.b16 %v1053
      %v1062 = vunpack.c.l.b16 %v1054
      %v1063 = vpack.c.b16 %v1060, %v1059
      %v1064 = vpack.c.b16 %v1062, %v1061
      %1065 = vrot.lane.b32.xlu0 %v313, 91
      %v1066 = vpop.permute.xlu0 %1065
      %1067 = vrot.lane.b32.xlu0 %v314, 91
      %v1068 = vpop.permute.xlu0 %1067
      %1069 = vrot.lane.b32.xlu0 %v315, 91
      %v1070 = vpop.permute.xlu0 %1069
      %1071 = vrot.lane.b32.xlu0 %v316, 91
      %v1072 = vpop.permute.xlu0 %1071
      %1073 = vrot.lane.b32.xlu0 %v317, 91
      %v1074 = vpop.permute.xlu0 %1073
      %1075 = vrot.lane.b32.xlu0 %v318, 91
      %v1076 = vpop.permute.xlu0 %1075
      %vm1077 = vcmask 744448
      %v1078 = vsel %vm1077, %v1066, %v1068
      %v1079 = vsel %vm1077, %v1068, %v1070
      %v1080 = vsel %vm1077, %v1072, %v1074
      %v1081 = vsel %vm1077, %v1074, %v1076
      %v1089 = vsel %vm342, %v1063, 0
      %v1092 = vsel %vm342, %v1064, 0
      %1094 = vmatpush.bf16.msra.mxu0 0
      %1095 = vmatpush.bf16.msra.mxu0 0
      %1096 = vmatpush.bf16.msra.mxu0 0
      %1097 = vmatpush.bf16.msra.mxu0 0
      %1098 = vmatpush.bf16.msra.mxu0 0
      %1099 = vmatpush.bf16.msra.mxu0 0
      %1100 = vmatpush.bf16.msra.mxu0 %v1080
      %1101 = vmatpush.bf16.msra.mxu0 %v1078
      %1102 = vmatmul.bf16.gmra.mxu0 %v1089
      %v1103 = vpop.f32.mrf.mxu0
      %v1104 = vadd.f32 0.0, %v1103
      %v1105 = vpop.f32.mrf.mxu0
      %v1106 = vadd.f32 0.0, %v1105
      %1107 = vmatmul.bf16.gmra.mxu0 %v1092
      %v1108 = vpop.f32.mrf.mxu0
      %v1109 = vadd.f32 0.0, %v1108
      %v1110 = vpop.f32.mrf.mxu0
      %v1111 = vadd.f32 0.0, %v1110
      %1112 = vdwg.mxu0
      %1113 = vmatpush.bf16.msra.mxu0 0
      %1114 = vmatpush.bf16.msra.mxu0 0
      %1115 = vmatpush.bf16.msra.mxu0 0
      %1116 = vmatpush.bf16.msra.mxu0 0
      %1117 = vmatpush.bf16.msra.mxu0 0
      %1118 = vmatpush.bf16.msra.mxu0 0
      %1119 = vmatpush.bf16.msra.mxu0 %v1081
      %1120 = vmatpush.bf16.msra.mxu0 %v1079
      %1121 = vmatmul.bf16.gmra.mxu0 %v1089
      %v1122 = vpop.f32.mrf.mxu0
      %v1123 = vadd.f32 0.0, %v1122
      %v1124 = vpop.f32.mrf.mxu0
      %v1125 = vadd.f32 0.0, %v1124
      %1126 = vmatmul.bf16.gmra.mxu0 %v1092
      %v1127 = vpop.f32.mrf.mxu0
      %v1128 = vadd.f32 0.0, %v1127
      %v1129 = vpop.f32.mrf.mxu0
      %v1130 = vadd.f32 0.0, %v1129
      %1131 = vdwg.mxu0
      %1132 = vmatpush.bf16.msra.mxu0 0
      %1133 = vmatpush.bf16.msra.mxu0 0
      %1134 = vmatpush.bf16.msra.mxu0 0
      %1135 = vmatpush.bf16.msra.mxu0 0
      %1136 = vmatpush.bf16.msra.mxu0 0
      %1137 = vmatpush.bf16.msra.mxu0 0
      %1138 = vmatpush.bf16.msra.mxu0 %v1076
      %1139 = vmatpush.bf16.msra.mxu0 %v1070
      %1140 = vmatmul.bf16.gmra.mxu0 %v1089
      %v1141 = vpop.f32.mrf.mxu0
      %v1142 = vadd.f32 0.0, %v1141
      %v1143 = vpop.f32.mrf.mxu0
      %v1144 = vadd.f32 0.0, %v1143
      %1145 = vmatmul.bf16.gmra.mxu0 %v1092
      %v1146 = vpop.f32.mrf.mxu0
      %v1147 = vadd.f32 0.0, %v1146
      %v1148 = vpop.f32.mrf.mxu0
      %v1149 = vadd.f32 0.0, %v1148
      %1150 = vdwg.mxu0
      %v1151 = vadd.f32 %v1038, %v1104
      %v1152 = vadd.f32 %v1039, %v1123
      %v1153 = vadd.f32 %v1040, %v1142
      %v1154 = vadd.f32 %v1041, %v1106
      %v1155 = vadd.f32 %v1042, %v1125
      %v1156 = vadd.f32 %v1043, %v1144
      %v1157 = vadd.f32 %v1044, %v1109
      %v1158 = vadd.f32 %v1045, %v1128
      %v1159 = vadd.f32 %v1046, %v1147
      %v1160 = vadd.f32 %v1047, %v1111
      %v1161 = vadd.f32 %v1048, %v1130
      %v1162 = vadd.f32 %v1049, %v1149
      %s1163 = scalar_lea.vmem %s1, 128
      %v1164 = vld [vmem:[%s1163] sm:$0xf]
      %v1165 = vld [vmem:[%s1163 + $0x4] sm:$0xf]
      %v1166 = vld [vmem:[%s1163 + $0x8] sm:$0xf]
      %v1167 = vld [vmem:[%s1163 + $0xc] sm:$0xf]
      %v1172 = vunpack.c.l.b16 %v1164
      %v1173 = vunpack.c.l.b16 %v1165
      %v1174 = vunpack.c.l.b16 %v1166
      %v1175 = vunpack.c.l.b16 %v1167
      %v1176 = vpack.c.b16 %v1173, %v1172
      %v1177 = vpack.c.b16 %v1175, %v1174
      %1178 = vrot.lane.b32.xlu0 %v313, 90
      %v1179 = vpop.permute.xlu0 %1178
      %1180 = vrot.lane.b32.xlu0 %v314, 90
      %v1181 = vpop.permute.xlu0 %1180
      %1182 = vrot.lane.b32.xlu0 %v315, 90
      %v1183 = vpop.permute.xlu0 %1182
      %1184 = vrot.lane.b32.xlu0 %v316, 90
      %v1185 = vpop.permute.xlu0 %1184
      %1186 = vrot.lane.b32.xlu0 %v317, 90
      %v1187 = vpop.permute.xlu0 %1186
      %1188 = vrot.lane.b32.xlu0 %v318, 90
      %v1189 = vpop.permute.xlu0 %1188
      %vm1190 = vcmask 736256
      %v1191 = vsel %vm1190, %v1179, %v1181
      %v1192 = vsel %vm1190, %v1181, %v1183
      %v1193 = vsel %vm1190, %v1185, %v1187
      %v1194 = vsel %vm1190, %v1187, %v1189
      %v1202 = vsel %vm342, %v1176, 0
      %v1205 = vsel %vm342, %v1177, 0
      %1207 = vmatpush.bf16.msra.mxu0 0
      %1208 = vmatpush.bf16.msra.mxu0 0
      %1209 = vmatpush.bf16.msra.mxu0 0
      %1210 = vmatpush.bf16.msra.mxu0 0
      %1211 = vmatpush.bf16.msra.mxu0 0
      %1212 = vmatpush.bf16.msra.mxu0 0
      %1213 = vmatpush.bf16.msra.mxu0 %v1193
      %1214 = vmatpush.bf16.msra.mxu0 %v1191
      %1215 = vmatmul.bf16.gmra.mxu0 %v1202
      %v1216 = vpop.f32.mrf.mxu0
      %v1217 = vadd.f32 0.0, %v1216
      %v1218 = vpop.f32.mrf.mxu0
      %v1219 = vadd.f32 0.0, %v1218
      %1220 = vmatmul.bf16.gmra.mxu0 %v1205
      %v1221 = vpop.f32.mrf.mxu0
      %v1222 = vadd.f32 0.0, %v1221
      %v1223 = vpop.f32.mrf.mxu0
      %v1224 = vadd.f32 0.0, %v1223
      %1225 = vdwg.mxu0
      %1226 = vmatpush.bf16.msra.mxu0 0
      %1227 = vmatpush.bf16.msra.mxu0 0
      %1228 = vmatpush.bf16.msra.mxu0 0
      %1229 = vmatpush.bf16.msra.mxu0 0
      %1230 = vmatpush.bf16.msra.mxu0 0
      %1231 = vmatpush.bf16.msra.mxu0 0
      %1232 = vmatpush.bf16.msra.mxu0 %v1194
      %1233 = vmatpush.bf16.msra.mxu0 %v1192
      %1234 = vmatmul.bf16.gmra.mxu0 %v1202
      %v1235 = vpop.f32.mrf.mxu0
      %v1236 = vadd.f32 0.0, %v1235
      %v1237 = vpop.f32.mrf.mxu0
      %v1238 = vadd.f32 0.0, %v1237
      %1239 = vmatmul.bf16.gmra.mxu0 %v1205
      %v1240 = vpop.f32.mrf.mxu0
      %v1241 = vadd.f32 0.0, %v1240
      %v1242 = vpop.f32.mrf.mxu0
      %v1243 = vadd.f32 0.0, %v1242
      %1244 = vdwg.mxu0
      %1245 = vmatpush.bf16.msra.mxu0 0
      %1246 = vmatpush.bf16.msra.mxu0 0
      %1247 = vmatpush.bf16.msra.mxu0 0
      %1248 = vmatpush.bf16.msra.mxu0 0
      %1249 = vmatpush.bf16.msra.mxu0 0
      %1250 = vmatpush.bf16.msra.mxu0 0
      %1251 = vmatpush.bf16.msra.mxu0 %v1189
      %1252 = vmatpush.bf16.msra.mxu0 %v1183
      %1253 = vmatmul.bf16.gmra.mxu0 %v1202
      %v1254 = vpop.f32.mrf.mxu0
      %v1255 = vadd.f32 0.0, %v1254
      %v1256 = vpop.f32.mrf.mxu0
      %v1257 = vadd.f32 0.0, %v1256
      %1258 = vmatmul.bf16.gmra.mxu0 %v1205
      %v1259 = vpop.f32.mrf.mxu0
      %v1260 = vadd.f32 0.0, %v1259
      %v1261 = vpop.f32.mrf.mxu0
      %v1262 = vadd.f32 0.0, %v1261
      %1263 = vdwg.mxu0
      %v1264 = vadd.f32 %v1151, %v1217
      %v1265 = vadd.f32 %v1152, %v1236
      %v1266 = vadd.f32 %v1153, %v1255
      %v1267 = vadd.f32 %v1154, %v1219
      %v1268 = vadd.f32 %v1155, %v1238
      %v1269 = vadd.f32 %v1156, %v1257
      %v1270 = vadd.f32 %v1157, %v1222
      %v1271 = vadd.f32 %v1158, %v1241
      %v1272 = vadd.f32 %v1159, %v1260
      %v1273 = vadd.f32 %v1160, %v1224
      %v1274 = vadd.f32 %v1161, %v1243
      %v1275 = vadd.f32 %v1162, %v1262
      %v1276 = vld [vmem:[%s2] sm:$0xff]
      %v1277 = vld [vmem:[%s2 + $0x8] sm:$0xff]
      %v1278 = vld [vmem:[%s2 + $0x10] sm:$0xff]
      %v1279 = vld [vmem:[%s2 + $0x18] sm:$0xff]
      %1281 = vset.pattern.permute.xlu0 0
      %1282 = vperm.xlu0 %1281, %v1276
      %v1283 = vpop.permute.xlu0 %1282
      %1286 = vset.pattern.permute.xlu0 0
      %1287 = vperm.xlu0 %1286, %v1277
      %v1288 = vpop.permute.xlu0 %1287
      %1291 = vset.pattern.permute.xlu0 0
      %1292 = vperm.xlu0 %1291, %v1278
      %v1293 = vpop.permute.xlu0 %1292
      %1296 = vset.pattern.permute.xlu0 0
      %1297 = vperm.xlu0 %1296, %v1279
      %v1298 = vpop.permute.xlu0 %1297
      %v1300 = vadd.f32 %v1264, %v1283
      %v1301 = vadd.f32 %v1265, %v1283
      %v1302 = vadd.f32 %v1266, %v1283
      %v1303 = vadd.f32 %v1267, %v1288
      %v1304 = vadd.f32 %v1268, %v1288
      %v1305 = vadd.f32 %v1269, %v1288
      %v1306 = vadd.f32 %v1270, %v1293
      %v1307 = vadd.f32 %v1271, %v1293
      %v1308 = vadd.f32 %v1272, %v1293
      %v1309 = vadd.f32 %v1273, %v1298
      %v1310 = vadd.f32 %v1274, %v1298
      %v1311 = vadd.f32 %v1275, %v1298
      %v1313 = vperm.slane %v265, 0
      %v1314 = vperm.slane %v265, 1
      %v1315 = vperm.slane %v265, 2
      %v1319 = vmul.f32 %v1300, %v1313
      %v1320 = vmul.f32 %v1301, %v1314
      %v1321 = vmul.f32 %v1302, %v1315
      %v1322 = vmul.f32 %v1303, %v1313
      %v1323 = vmul.f32 %v1304, %v1314
      %v1324 = vmul.f32 %v1305, %v1315
      %v1325 = vmul.f32 %v1306, %v1313
      %v1326 = vmul.f32 %v1307, %v1314
      %v1327 = vmul.f32 %v1308, %v1315
      %v1328 = vmul.f32 %v1309, %v1313
      %v1329 = vmul.f32 %v1310, %v1314
      %v1330 = vmul.f32 %v1311, %v1315
      %v1331 = vadd.f32 %v1319, %v1320
      %vm1332 = vcmask 244736
      %v1333 = vsel %vm1332, %v1321, 0.0
      %v1334 = vadd.f32 %v1331, %v1333
      %1335 = vadd.xlane.f32.xlu0 %v1334
      %v1336 = vpop.xlane.xlu0 %1335
      %v1337 = vadd.f32 %v1322, %v1323
      %v1338 = vsel %vm1332, %v1324, 0.0
      %v1339 = vadd.f32 %v1337, %v1338
      %1340 = vadd.xlane.f32.xlu0 %v1339
      %v1341 = vpop.xlane.xlu0 %1340
      %v1342 = vadd.f32 %v1325, %v1326
      %v1343 = vsel %vm1332, %v1327, 0.0
      %v1344 = vadd.f32 %v1342, %v1343
      %1345 = vadd.xlane.f32.xlu0 %v1344
      %v1346 = vpop.xlane.xlu0 %1345
      %v1347 = vadd.f32 %v1328, %v1329
      %v1348 = vsel %vm1332, %v1330, 0.0
      %v1349 = vadd.f32 %v1347, %v1348
      %1350 = vadd.xlane.f32.xlu0 %v1349
      %v1351 = vpop.xlane.xlu0 %1350
      %v1352 = vmul.f32 %v1336, 0.00390625
      %v1353 = vmul.f32 %v1341, 0.00390625
      %v1354 = vmul.f32 %v1346, 0.00390625
      %v1355 = vmul.f32 %v1351, 0.00390625
      %v1356 = vsub.f32 %v1300, %v1352
      %v1357 = vsub.f32 %v1301, %v1352
      %v1358 = vsub.f32 %v1302, %v1352
      %v1359 = vsub.f32 %v1303, %v1353
      %v1360 = vsub.f32 %v1304, %v1353
      %v1361 = vsub.f32 %v1305, %v1353
      %v1362 = vsub.f32 %v1306, %v1354
      %v1363 = vsub.f32 %v1307, %v1354
      %v1364 = vsub.f32 %v1308, %v1354
      %v1365 = vsub.f32 %v1309, %v1355
      %v1366 = vsub.f32 %v1310, %v1355
      %v1367 = vsub.f32 %v1311, %v1355
      %v1368 = vmul.f32 %v1356, %v1313
      %v1369 = vmul.f32 %v1357, %v1314
      %v1370 = vmul.f32 %v1358, %v1315
      %v1371 = vmul.f32 %v1359, %v1313
      %v1372 = vmul.f32 %v1360, %v1314
      %v1373 = vmul.f32 %v1361, %v1315
      %v1374 = vmul.f32 %v1362, %v1313
      %v1375 = vmul.f32 %v1363, %v1314
      %v1376 = vmul.f32 %v1364, %v1315
      %v1377 = vmul.f32 %v1365, %v1313
      %v1378 = vmul.f32 %v1366, %v1314
      %v1379 = vmul.f32 %v1367, %v1315
      %v1380 = vmul.f32 %v1368, %v1368
      %v1381 = vmul.f32 %v1369, %v1369
      %v1382 = vmul.f32 %v1370, %v1370
      %v1383 = vmul.f32 %v1371, %v1371
      %v1384 = vmul.f32 %v1372, %v1372
      %v1385 = vmul.f32 %v1373, %v1373
      %v1386 = vmul.f32 %v1374, %v1374
      %v1387 = vmul.f32 %v1375, %v1375
      %v1388 = vmul.f32 %v1376, %v1376
      %v1389 = vmul.f32 %v1377, %v1377
      %v1390 = vmul.f32 %v1378, %v1378
      %v1391 = vmul.f32 %v1379, %v1379
      %v1392 = vadd.f32 %v1380, %v1381
      %v1393 = vsel %vm1332, %v1382, 0.0
      %v1394 = vadd.f32 %v1392, %v1393
      %1395 = vadd.xlane.f32.xlu0 %v1394
      %v1396 = vpop.xlane.xlu0 %1395
      %v1397 = vadd.f32 %v1383, %v1384
      %v1398 = vsel %vm1332, %v1385, 0.0
      %v1399 = vadd.f32 %v1397, %v1398
      %1400 = vadd.xlane.f32.xlu0 %v1399
      %v1401 = vpop.xlane.xlu0 %1400
      %v1402 = vadd.f32 %v1386, %v1387
      %v1403 = vsel %vm1332, %v1388, 0.0
      %v1404 = vadd.f32 %v1402, %v1403
      %1405 = vadd.xlane.f32.xlu0 %v1404
      %v1406 = vpop.xlane.xlu0 %1405
      %v1407 = vadd.f32 %v1389, %v1390
      %v1408 = vsel %vm1332, %v1391, 0.0
      %v1409 = vadd.f32 %v1407, %v1408
      %1410 = vadd.xlane.f32.xlu0 %v1409
      %v1411 = vpop.xlane.xlu0 %1410
      %v1412 = vmul.f32 %v1396, 0.00390625
      %v1413 = vmul.f32 %v1401, 0.00390625
      %v1414 = vmul.f32 %v1406, 0.00390625
      %v1415 = vmul.f32 %v1411, 0.00390625
      %v1416 = vadd.f32 %v1412, 1e-05
      %v1417 = vadd.f32 %v1413, 1e-05
      %v1418 = vadd.f32 %v1414, 1e-05
      %v1419 = vadd.f32 %v1415, 1e-05
      %v1420 = vrsqrt.pop %v1416
      %v1421 = vmul.f32 %v1420, %v1416
      %v1422 = vmul.f32 %v1421, %v1420
      %v1423 = vmul.f32 0.5, %v1422
      %v1424 = vsub.f32 1.5, %v1423
      %v1425 = vmul.f32 %v1420, %v1424
      %vm1426 = vweird.f32 %v1416
      %vm1427 = vweird.f32 %v1420
      %vm1428 = vmor %vm1426, %vm1427
      %v1429 = vsel %vm1428, %v1420, %v1425
      %v1430 = vrsqrt.pop %v1417
      %v1431 = vmul.f32 %v1430, %v1417
      %v1432 = vmul.f32 %v1431, %v1430
      %v1433 = vmul.f32 0.5, %v1432
      %v1434 = vsub.f32 1.5, %v1433
      %v1435 = vmul.f32 %v1430, %v1434
      %vm1436 = vweird.f32 %v1417
      %vm1437 = vweird.f32 %v1430
      %vm1438 = vmor %vm1436, %vm1437
      %v1439 = vsel %vm1438, %v1430, %v1435
      %v1440 = vrsqrt.pop %v1418
      %v1441 = vmul.f32 %v1440, %v1418
      %v1442 = vmul.f32 %v1441, %v1440
      %v1443 = vmul.f32 0.5, %v1442
      %v1444 = vsub.f32 1.5, %v1443
      %v1445 = vmul.f32 %v1440, %v1444
      %vm1446 = vweird.f32 %v1418
      %vm1447 = vweird.f32 %v1440
      %vm1448 = vmor %vm1446, %vm1447
      %v1449 = vsel %vm1448, %v1440, %v1445
      %v1450 = vrsqrt.pop %v1419
      %v1451 = vmul.f32 %v1450, %v1419
      %v1452 = vmul.f32 %v1451, %v1450
      %v1453 = vmul.f32 0.5, %v1452
      %v1454 = vsub.f32 1.5, %v1453
      %v1455 = vmul.f32 %v1450, %v1454
      %vm1456 = vweird.f32 %v1419
      %vm1457 = vweird.f32 %v1450
      %vm1458 = vmor %vm1456, %vm1457
      %v1459 = vsel %vm1458, %v1450, %v1455
      %v1460 = vmul.f32 %v1356, %v1429
      %v1461 = vmul.f32 %v1357, %v1429
      %v1462 = vmul.f32 %v1358, %v1429
      %v1463 = vmul.f32 %v1359, %v1439
      %v1464 = vmul.f32 %v1360, %v1439
      %v1465 = vmul.f32 %v1361, %v1439
      %v1466 = vmul.f32 %v1362, %v1449
      %v1467 = vmul.f32 %v1363, %v1449
      %v1468 = vmul.f32 %v1364, %v1449
      %v1469 = vmul.f32 %v1365, %v1459
      %v1470 = vmul.f32 %v1366, %v1459
      %v1471 = vmul.f32 %v1367, %v1459
      %v1472 = vmax.f32 %v1460, 0.0
      %v1473 = vmax.f32 %v1461, 0.0
      %v1474 = vmax.f32 %v1462, 0.0
      %v1475 = vmax.f32 %v1463, 0.0
      %v1476 = vmax.f32 %v1464, 0.0
      %v1477 = vmax.f32 %v1465, 0.0
      %v1478 = vmax.f32 %v1466, 0.0
      %v1479 = vmax.f32 %v1467, 0.0
      %v1480 = vmax.f32 %v1468, 0.0
      %v1481 = vmax.f32 %v1469, 0.0
      %v1482 = vmax.f32 %v1470, 0.0
      %v1483 = vmax.f32 %v1471, 0.0
      %v1484 = vmul.f32 %v1472, %v1313
      %v1485 = vmul.f32 %v1473, %v1314
      %v1486 = vmul.f32 %v1474, %v1315
      %v1487 = vmul.f32 %v1475, %v1313
      %v1488 = vmul.f32 %v1476, %v1314
      %v1489 = vmul.f32 %v1477, %v1315
      %v1490 = vmul.f32 %v1478, %v1313
      %v1491 = vmul.f32 %v1479, %v1314
      %v1492 = vmul.f32 %v1480, %v1315
      %v1493 = vmul.f32 %v1481, %v1313
      %v1494 = vmul.f32 %v1482, %v1314
      %v1495 = vmul.f32 %v1483, %v1315
      %v1496 = vpack.c.bf16 %v1485, %v1484
      %v1497 = vpack.c.bf16 %v1486, %v1486
      %v1498 = vpack.c.bf16 %v1488, %v1487
      %v1499 = vpack.c.bf16 %v1489, %v1489
      %v1500 = vpack.c.bf16 %v1491, %v1490
      %v1501 = vpack.c.bf16 %v1492, %v1492
      %v1502 = vpack.c.bf16 %v1494, %v1493
      %v1503 = vpack.c.bf16 %v1495, %v1495
      %v1512 = vunpack.c.l.b16 %v1496
      %v1513 = vunpack.c.h.b16 %v1496
      %v1514 = vunpack.c.l.b16 %v1497
      %v1515 = vunpack.c.l.b16 %v1498
      %v1516 = vunpack.c.h.b16 %v1498
      %v1517 = vunpack.c.l.b16 %v1499
      %v1518 = vunpack.c.l.b16 %v1500
      %v1519 = vunpack.c.h.b16 %v1500
      %v1520 = vunpack.c.l.b16 %v1501
      %v1521 = vunpack.c.l.b16 %v1502
      %v1522 = vunpack.c.h.b16 %v1502
      %v1523 = vunpack.c.l.b16 %v1503
      %v1524 = vpack.c.b16 %v1515, %v1512
      %v1525 = vpack.c.b16 %v1516, %v1513
      %v1526 = vpack.c.b16 %v1517, %v1514
      %v1527 = vpack.c.b16 %v1521, %v1518
      %v1528 = vpack.c.b16 %v1522, %v1519
      %v1529 = vpack.c.b16 %v1523, %v1520
      %1530 = vrot.lane.b32.xlu0 %v1524, 19
      %v1531 = vpop.permute.xlu0 %1530
      %1532 = vrot.lane.b32.xlu0 %v1525, 19
      %v1533 = vpop.permute.xlu0 %1532
      %1534 = vrot.lane.b32.xlu0 %v1526, 19
      %v1535 = vpop.permute.xlu0 %1534
      %1536 = vrot.lane.b32.xlu0 %v1527, 19
      %v1537 = vpop.permute.xlu0 %1536
      %1538 = vrot.lane.b32.xlu0 %v1528, 19
      %v1539 = vpop.permute.xlu0 %1538
      %1540 = vrot.lane.b32.xlu0 %v1529, 19
      %v1541 = vpop.permute.xlu0 %1540
      %vm1542 = vcmask 154624
      %v1543 = vsel %vm1542, %v1531, %v1533
      %v1544 = vsel %vm1542, %v1533, %v1535
      %v1545 = vsel %vm1542, %v1537, %v1539
      %v1546 = vsel %vm1542, %v1539, %v1541
      %vm1549 = vcmask 154624
      %v1552 = vsel %vm1549, 0, %v1531
      %v1555 = vsel %vm1549, 0, %v1537
      %vm1557 = vcmask 400384
      %v1559 = vsel %vm1557, %v1544, 0
      %v1562 = vsel %vm1557, %v1546, 0
      %v1564 = vld [vmem:[%s3] sm:$0xf]
      %v1565 = vld [vmem:[%s3 + $0x4] sm:$0xf]
      %v1566 = vld [vmem:[%s3 + $0x8] sm:$0xf]
      %v1567 = vld [vmem:[%s3 + $0xc] sm:$0xf]
      %s1568 = scalar_lea.vmem %s3, 16
      %v1569 = vld [vmem:[%s1568] sm:$0xf]
      %v1570 = vld [vmem:[%s1568 + $0x4] sm:$0xf]
      %v1571 = vld [vmem:[%s1568 + $0x8] sm:$0xf]
      %v1572 = vld [vmem:[%s1568 + $0xc] sm:$0xf]
      %v1577 = vunpack.c.l.b16 %v1569
      %v1578 = vunpack.c.l.b16 %v1570
      %v1579 = vunpack.c.l.b16 %v1571
      %v1580 = vunpack.c.l.b16 %v1572
      %v1581 = vpack.c.b16 %v1578, %v1577
      %v1582 = vpack.c.b16 %v1580, %v1579
      %1587 = vrot.lane.b32.xlu0 %v1552, 127
      %v1588 = vpop.permute.xlu0 %1587
      %1589 = vrot.lane.b32.xlu0 %v1543, 127
      %v1590 = vpop.permute.xlu0 %1589
      %1591 = vrot.lane.b32.xlu0 %v1559, 127
      %v1592 = vpop.permute.xlu0 %1591
      %1593 = vrot.lane.b32.xlu0 %v1555, 127
      %v1594 = vpop.permute.xlu0 %1593
      %1595 = vrot.lane.b32.xlu0 %v1545, 127
      %v1596 = vpop.permute.xlu0 %1595
      %1597 = vrot.lane.b32.xlu0 %v1562, 127
      %v1598 = vpop.permute.xlu0 %1597
      %v1599 = vsel %vm331, %v1588, %v1590
      %v1600 = vsel %vm331, %v1590, %v1592
      %v1601 = vsel %vm331, %v1594, %v1596
      %v1602 = vsel %vm331, %v1596, %v1598
      %v1610 = vsel %vm342, %v1581, 0
      %v1613 = vsel %vm342, %v1582, 0
      %1615 = vmatpush.bf16.msra.mxu0 0
      %1616 = vmatpush.bf16.msra.mxu0 0
      %1617 = vmatpush.bf16.msra.mxu0 0
      %1618 = vmatpush.bf16.msra.mxu0 0
      %1619 = vmatpush.bf16.msra.mxu0 0
      %1620 = vmatpush.bf16.msra.mxu0 0
      %1621 = vmatpush.bf16.msra.mxu0 %v1601
      %1622 = vmatpush.bf16.msra.mxu0 %v1599
      %1623 = vmatmul.bf16.gmra.mxu0 %v1610
      %v1624 = vpop.f32.mrf.mxu0
      %v1625 = vadd.f32 0.0, %v1624
      %v1626 = vpop.f32.mrf.mxu0
      %v1627 = vadd.f32 0.0, %v1626
      %1628 = vmatmul.bf16.gmra.mxu0 %v1613
      %v1629 = vpop.f32.mrf.mxu0
      %v1630 = vadd.f32 0.0, %v1629
      %v1631 = vpop.f32.mrf.mxu0
      %v1632 = vadd.f32 0.0, %v1631
      %1633 = vdwg.mxu0
      %1634 = vmatpush.bf16.msra.mxu0 0
      %1635 = vmatpush.bf16.msra.mxu0 0
      %1636 = vmatpush.bf16.msra.mxu0 0
      %1637 = vmatpush.bf16.msra.mxu0 0
      %1638 = vmatpush.bf16.msra.mxu0 0
      %1639 = vmatpush.bf16.msra.mxu0 0
      %1640 = vmatpush.bf16.msra.mxu0 %v1602
      %1641 = vmatpush.bf16.msra.mxu0 %v1600
      %1642 = vmatmul.bf16.gmra.mxu0 %v1610
      %v1643 = vpop.f32.mrf.mxu0
      %v1644 = vadd.f32 0.0, %v1643
      %v1645 = vpop.f32.mrf.mxu0
      %v1646 = vadd.f32 0.0, %v1645
      %1647 = vmatmul.bf16.gmra.mxu0 %v1613
      %v1648 = vpop.f32.mrf.mxu0
      %v1649 = vadd.f32 0.0, %v1648
      %v1650 = vpop.f32.mrf.mxu0
      %v1651 = vadd.f32 0.0, %v1650
      %1652 = vdwg.mxu0
      %1653 = vmatpush.bf16.msra.mxu0 0
      %1654 = vmatpush.bf16.msra.mxu0 0
      %1655 = vmatpush.bf16.msra.mxu0 0
      %1656 = vmatpush.bf16.msra.mxu0 0
      %1657 = vmatpush.bf16.msra.mxu0 0
      %1658 = vmatpush.bf16.msra.mxu0 0
      %1659 = vmatpush.bf16.msra.mxu0 %v1598
      %1660 = vmatpush.bf16.msra.mxu0 %v1592
      %1661 = vmatmul.bf16.gmra.mxu0 %v1610
      %v1662 = vpop.f32.mrf.mxu0
      %v1663 = vadd.f32 0.0, %v1662
      %v1664 = vpop.f32.mrf.mxu0
      %v1665 = vadd.f32 0.0, %v1664
      %1666 = vmatmul.bf16.gmra.mxu0 %v1613
      %v1667 = vpop.f32.mrf.mxu0
      %v1668 = vadd.f32 0.0, %v1667
      %v1669 = vpop.f32.mrf.mxu0
      %v1670 = vadd.f32 0.0, %v1669
      %1671 = vdwg.mxu0
      %v1676 = vunpack.c.l.b16 %v1564
      %v1677 = vunpack.c.l.b16 %v1565
      %v1678 = vunpack.c.l.b16 %v1566
      %v1679 = vunpack.c.l.b16 %v1567
      %v1680 = vpack.c.b16 %v1677, %v1676
      %v1681 = vpack.c.b16 %v1679, %v1678
      %v1683 = vsel %vm342, %v1680, 0
      %v1686 = vsel %vm342, %v1681, 0
      %1688 = vmatpush.bf16.msra.mxu0 0
      %1689 = vmatpush.bf16.msra.mxu0 0
      %1690 = vmatpush.bf16.msra.mxu0 0
      %1691 = vmatpush.bf16.msra.mxu0 0
      %1692 = vmatpush.bf16.msra.mxu0 0
      %1693 = vmatpush.bf16.msra.mxu0 0
      %1694 = vmatpush.bf16.msra.mxu0 %v1555
      %1695 = vmatpush.bf16.msra.mxu0 %v1552
      %1696 = vmatmul.bf16.gmra.mxu0 %v1683
      %v1697 = vpop.f32.mrf.mxu0
      %v1698 = vadd.f32 %v1625, %v1697
      %v1699 = vpop.f32.mrf.mxu0
      %v1700 = vadd.f32 %v1627, %v1699
      %1701 = vmatmul.bf16.gmra.mxu0 %v1686
      %v1702 = vpop.f32.mrf.mxu0
      %v1703 = vadd.f32 %v1630, %v1702
      %v1704 = vpop.f32.mrf.mxu0
      %v1705 = vadd.f32 %v1632, %v1704
      %1706 = vdwg.mxu0
      %1707 = vmatpush.bf16.msra.mxu0 0
      %1708 = vmatpush.bf16.msra.mxu0 0
      %1709 = vmatpush.bf16.msra.mxu0 0
      %1710 = vmatpush.bf16.msra.mxu0 0
      %1711 = vmatpush.bf16.msra.mxu0 0
      %1712 = vmatpush.bf16.msra.mxu0 0
      %1713 = vmatpush.bf16.msra.mxu0 %v1545
      %1714 = vmatpush.bf16.msra.mxu0 %v1543
      %1715 = vmatmul.bf16.gmra.mxu0 %v1683
      %v1716 = vpop.f32.mrf.mxu0
      %v1717 = vadd.f32 %v1644, %v1716
      %v1718 = vpop.f32.mrf.mxu0
      %v1719 = vadd.f32 %v1646, %v1718
      %1720 = vmatmul.bf16.gmra.mxu0 %v1686
      %v1721 = vpop.f32.mrf.mxu0
      %v1722 = vadd.f32 %v1649, %v1721
      %v1723 = vpop.f32.mrf.mxu0
      %v1724 = vadd.f32 %v1651, %v1723
      %1725 = vdwg.mxu0
      %1726 = vmatpush.bf16.msra.mxu0 0
      %1727 = vmatpush.bf16.msra.mxu0 0
      %1728 = vmatpush.bf16.msra.mxu0 0
      %1729 = vmatpush.bf16.msra.mxu0 0
      %1730 = vmatpush.bf16.msra.mxu0 0
      %1731 = vmatpush.bf16.msra.mxu0 0
      %1732 = vmatpush.bf16.msra.mxu0 %v1562
      %1733 = vmatpush.bf16.msra.mxu0 %v1559
      %1734 = vmatmul.bf16.gmra.mxu0 %v1683
      %v1735 = vpop.f32.mrf.mxu0
      %v1736 = vadd.f32 %v1663, %v1735
      %v1737 = vpop.f32.mrf.mxu0
      %v1738 = vadd.f32 %v1665, %v1737
      %1739 = vmatmul.bf16.gmra.mxu0 %v1686
      %v1740 = vpop.f32.mrf.mxu0
      %v1741 = vadd.f32 %v1668, %v1740
      %v1742 = vpop.f32.mrf.mxu0
      %v1743 = vadd.f32 %v1670, %v1742
      %1744 = vdwg.mxu0
      %s1745 = scalar_lea.vmem %s3, 32
      %v1746 = vld [vmem:[%s1745] sm:$0xf]
      %v1747 = vld [vmem:[%s1745 + $0x4] sm:$0xf]
      %v1748 = vld [vmem:[%s1745 + $0x8] sm:$0xf]
      %v1749 = vld [vmem:[%s1745 + $0xc] sm:$0xf]
      %v1754 = vunpack.c.l.b16 %v1746
      %v1755 = vunpack.c.l.b16 %v1747
      %v1756 = vunpack.c.l.b16 %v1748
      %v1757 = vunpack.c.l.b16 %v1749
      %v1758 = vpack.c.b16 %v1755, %v1754
      %v1759 = vpack.c.b16 %v1757, %v1756
      %1760 = vrot.lane.b32.xlu0 %v1552, 126
      %v1761 = vpop.permute.xlu0 %1760
      %1762 = vrot.lane.b32.xlu0 %v1543, 126
      %v1763 = vpop.permute.xlu0 %1762
      %1764 = vrot.lane.b32.xlu0 %v1559, 126
      %v1765 = vpop.permute.xlu0 %1764
      %1766 = vrot.lane.b32.xlu0 %v1555, 126
      %v1767 = vpop.permute.xlu0 %1766
      %1768 = vrot.lane.b32.xlu0 %v1545, 126
      %v1769 = vpop.permute.xlu0 %1768
      %1770 = vrot.lane.b32.xlu0 %v1562, 126
      %v1771 = vpop.permute.xlu0 %1770
      %v1772 = vsel %vm512, %v1761, %v1763
      %v1773 = vsel %vm512, %v1763, %v1765
      %v1774 = vsel %vm512, %v1767, %v1769
      %v1775 = vsel %vm512, %v1769, %v1771
      %v1783 = vsel %vm342, %v1758, 0
      %v1786 = vsel %vm342, %v1759, 0
      %1788 = vmatpush.bf16.msra.mxu0 0
      %1789 = vmatpush.bf16.msra.mxu0 0
      %1790 = vmatpush.bf16.msra.mxu0 0
      %1791 = vmatpush.bf16.msra.mxu0 0
      %1792 = vmatpush.bf16.msra.mxu0 0
      %1793 = vmatpush.bf16.msra.mxu0 0
      %1794 = vmatpush.bf16.msra.mxu0 %v1774
      %1795 = vmatpush.bf16.msra.mxu0 %v1772
      %1796 = vmatmul.bf16.gmra.mxu0 %v1783
      %v1797 = vpop.f32.mrf.mxu0
      %v1798 = vadd.f32 0.0, %v1797
      %v1799 = vpop.f32.mrf.mxu0
      %v1800 = vadd.f32 0.0, %v1799
      %1801 = vmatmul.bf16.gmra.mxu0 %v1786
      %v1802 = vpop.f32.mrf.mxu0
      %v1803 = vadd.f32 0.0, %v1802
      %v1804 = vpop.f32.mrf.mxu0
      %v1805 = vadd.f32 0.0, %v1804
      %1806 = vdwg.mxu0
      %1807 = vmatpush.bf16.msra.mxu0 0
      %1808 = vmatpush.bf16.msra.mxu0 0
      %1809 = vmatpush.bf16.msra.mxu0 0
      %1810 = vmatpush.bf16.msra.mxu0 0
      %1811 = vmatpush.bf16.msra.mxu0 0
      %1812 = vmatpush.bf16.msra.mxu0 0
      %1813 = vmatpush.bf16.msra.mxu0 %v1775
      %1814 = vmatpush.bf16.msra.mxu0 %v1773
      %1815 = vmatmul.bf16.gmra.mxu0 %v1783
      %v1816 = vpop.f32.mrf.mxu0
      %v1817 = vadd.f32 0.0, %v1816
      %v1818 = vpop.f32.mrf.mxu0
      %v1819 = vadd.f32 0.0, %v1818
      %1820 = vmatmul.bf16.gmra.mxu0 %v1786
      %v1821 = vpop.f32.mrf.mxu0
      %v1822 = vadd.f32 0.0, %v1821
      %v1823 = vpop.f32.mrf.mxu0
      %v1824 = vadd.f32 0.0, %v1823
      %1825 = vdwg.mxu0
      %1826 = vmatpush.bf16.msra.mxu0 0
      %1827 = vmatpush.bf16.msra.mxu0 0
      %1828 = vmatpush.bf16.msra.mxu0 0
      %1829 = vmatpush.bf16.msra.mxu0 0
      %1830 = vmatpush.bf16.msra.mxu0 0
      %1831 = vmatpush.bf16.msra.mxu0 0
      %1832 = vmatpush.bf16.msra.mxu0 %v1771
      %1833 = vmatpush.bf16.msra.mxu0 %v1765
      %1834 = vmatmul.bf16.gmra.mxu0 %v1783
      %v1835 = vpop.f32.mrf.mxu0
      %v1836 = vadd.f32 0.0, %v1835
      %v1837 = vpop.f32.mrf.mxu0
      %v1838 = vadd.f32 0.0, %v1837
      %1839 = vmatmul.bf16.gmra.mxu0 %v1786
      %v1840 = vpop.f32.mrf.mxu0
      %v1841 = vadd.f32 0.0, %v1840
      %v1842 = vpop.f32.mrf.mxu0
      %v1843 = vadd.f32 0.0, %v1842
      %1844 = vdwg.mxu0
      %v1845 = vadd.f32 %v1698, %v1798
      %v1846 = vadd.f32 %v1717, %v1817
      %v1847 = vadd.f32 %v1736, %v1836
      %v1848 = vadd.f32 %v1700, %v1800
      %v1849 = vadd.f32 %v1719, %v1819
      %v1850 = vadd.f32 %v1738, %v1838
      %v1851 = vadd.f32 %v1703, %v1803
      %v1852 = vadd.f32 %v1722, %v1822
      %v1853 = vadd.f32 %v1741, %v1841
      %v1854 = vadd.f32 %v1705, %v1805
      %v1855 = vadd.f32 %v1724, %v1824
      %v1856 = vadd.f32 %v1743, %v1843
      %s1857 = scalar_lea.vmem %s3, 48
      %v1858 = vld [vmem:[%s1857] sm:$0xf]
      %v1859 = vld [vmem:[%s1857 + $0x4] sm:$0xf]
      %v1860 = vld [vmem:[%s1857 + $0x8] sm:$0xf]
      %v1861 = vld [vmem:[%s1857 + $0xc] sm:$0xf]
      %v1866 = vunpack.c.l.b16 %v1858
      %v1867 = vunpack.c.l.b16 %v1859
      %v1868 = vunpack.c.l.b16 %v1860
      %v1869 = vunpack.c.l.b16 %v1861
      %v1870 = vpack.c.b16 %v1867, %v1866
      %v1871 = vpack.c.b16 %v1869, %v1868
      %1872 = vrot.lane.b32.xlu0 %v1552, 110
      %v1873 = vpop.permute.xlu0 %1872
      %1874 = vrot.lane.b32.xlu0 %v1543, 110
      %v1875 = vpop.permute.xlu0 %1874
      %1876 = vrot.lane.b32.xlu0 %v1559, 110
      %v1877 = vpop.permute.xlu0 %1876
      %1878 = vrot.lane.b32.xlu0 %v1555, 110
      %v1879 = vpop.permute.xlu0 %1878
      %1880 = vrot.lane.b32.xlu0 %v1545, 110
      %v1881 = vpop.permute.xlu0 %1880
      %1882 = vrot.lane.b32.xlu0 %v1562, 110
      %v1883 = vpop.permute.xlu0 %1882
      %v1884 = vsel %vm625, %v1873, %v1875
      %v1885 = vsel %vm625, %v1875, %v1877
      %v1886 = vsel %vm625, %v1879, %v1881
      %v1887 = vsel %vm625, %v1881, %v1883
      %v1895 = vsel %vm342, %v1870, 0
      %v1898 = vsel %vm342, %v1871, 0
      %1900 = vmatpush.bf16.msra.mxu0 0
      %1901 = vmatpush.bf16.msra.mxu0 0
      %1902 = vmatpush.bf16.msra.mxu0 0
      %1903 = vmatpush.bf16.msra.mxu0 0
      %1904 = vmatpush.bf16.msra.mxu0 0
      %1905 = vmatpush.bf16.msra.mxu0 0
      %1906 = vmatpush.bf16.msra.mxu0 %v1886
      %1907 = vmatpush.bf16.msra.mxu0 %v1884
      %1908 = vmatmul.bf16.gmra.mxu0 %v1895
      %v1909 = vpop.f32.mrf.mxu0
      %v1910 = vadd.f32 0.0, %v1909
      %v1911 = vpop.f32.mrf.mxu0
      %v1912 = vadd.f32 0.0, %v1911
      %1913 = vmatmul.bf16.gmra.mxu0 %v1898
      %v1914 = vpop.f32.mrf.mxu0
      %v1915 = vadd.f32 0.0, %v1914
      %v1916 = vpop.f32.mrf.mxu0
      %v1917 = vadd.f32 0.0, %v1916
      %1918 = vdwg.mxu0
      %1919 = vmatpush.bf16.msra.mxu0 0
      %1920 = vmatpush.bf16.msra.mxu0 0
      %1921 = vmatpush.bf16.msra.mxu0 0
      %1922 = vmatpush.bf16.msra.mxu0 0
      %1923 = vmatpush.bf16.msra.mxu0 0
      %1924 = vmatpush.bf16.msra.mxu0 0
      %1925 = vmatpush.bf16.msra.mxu0 %v1887
      %1926 = vmatpush.bf16.msra.mxu0 %v1885
      %1927 = vmatmul.bf16.gmra.mxu0 %v1895
      %v1928 = vpop.f32.mrf.mxu0
      %v1929 = vadd.f32 0.0, %v1928
      %v1930 = vpop.f32.mrf.mxu0
      %v1931 = vadd.f32 0.0, %v1930
      %1932 = vmatmul.bf16.gmra.mxu0 %v1898
      %v1933 = vpop.f32.mrf.mxu0
      %v1934 = vadd.f32 0.0, %v1933
      %v1935 = vpop.f32.mrf.mxu0
      %v1936 = vadd.f32 0.0, %v1935
      %1937 = vdwg.mxu0
      %1938 = vmatpush.bf16.msra.mxu0 0
      %1939 = vmatpush.bf16.msra.mxu0 0
      %1940 = vmatpush.bf16.msra.mxu0 0
      %1941 = vmatpush.bf16.msra.mxu0 0
      %1942 = vmatpush.bf16.msra.mxu0 0
      %1943 = vmatpush.bf16.msra.mxu0 0
      %1944 = vmatpush.bf16.msra.mxu0 %v1883
      %1945 = vmatpush.bf16.msra.mxu0 %v1877
      %1946 = vmatmul.bf16.gmra.mxu0 %v1895
      %v1947 = vpop.f32.mrf.mxu0
      %v1948 = vadd.f32 0.0, %v1947
      %v1949 = vpop.f32.mrf.mxu0
      %v1950 = vadd.f32 0.0, %v1949
      %1951 = vmatmul.bf16.gmra.mxu0 %v1898
      %v1952 = vpop.f32.mrf.mxu0
      %v1953 = vadd.f32 0.0, %v1952
      %v1954 = vpop.f32.mrf.mxu0
      %v1955 = vadd.f32 0.0, %v1954
      %1956 = vdwg.mxu0
      %v1957 = vadd.f32 %v1845, %v1910
      %v1958 = vadd.f32 %v1846, %v1929
      %v1959 = vadd.f32 %v1847, %v1948
      %v1960 = vadd.f32 %v1848, %v1912
      %v1961 = vadd.f32 %v1849, %v1931
      %v1962 = vadd.f32 %v1850, %v1950
      %v1963 = vadd.f32 %v1851, %v1915
      %v1964 = vadd.f32 %v1852, %v1934
      %v1965 = vadd.f32 %v1853, %v1953
      %v1966 = vadd.f32 %v1854, %v1917
      %v1967 = vadd.f32 %v1855, %v1936
      %v1968 = vadd.f32 %v1856, %v1955
      %s1969 = scalar_lea.vmem %s3, 64
      %v1970 = vld [vmem:[%s1969] sm:$0xf]
      %v1971 = vld [vmem:[%s1969 + $0x4] sm:$0xf]
      %v1972 = vld [vmem:[%s1969 + $0x8] sm:$0xf]
      %v1973 = vld [vmem:[%s1969 + $0xc] sm:$0xf]
      %v1978 = vunpack.c.l.b16 %v1970
      %v1979 = vunpack.c.l.b16 %v1971
      %v1980 = vunpack.c.l.b16 %v1972
      %v1981 = vunpack.c.l.b16 %v1973
      %v1982 = vpack.c.b16 %v1979, %v1978
      %v1983 = vpack.c.b16 %v1981, %v1980
      %1984 = vrot.lane.b32.xlu0 %v1552, 109
      %v1985 = vpop.permute.xlu0 %1984
      %1986 = vrot.lane.b32.xlu0 %v1543, 109
      %v1987 = vpop.permute.xlu0 %1986
      %1988 = vrot.lane.b32.xlu0 %v1559, 109
      %v1989 = vpop.permute.xlu0 %1988
      %1990 = vrot.lane.b32.xlu0 %v1555, 109
      %v1991 = vpop.permute.xlu0 %1990
      %1992 = vrot.lane.b32.xlu0 %v1545, 109
      %v1993 = vpop.permute.xlu0 %1992
      %1994 = vrot.lane.b32.xlu0 %v1562, 109
      %v1995 = vpop.permute.xlu0 %1994
      %v1996 = vsel %vm738, %v1985, %v1987
      %v1997 = vsel %vm738, %v1987, %v1989
      %v1998 = vsel %vm738, %v1991, %v1993
      %v1999 = vsel %vm738, %v1993, %v1995
      %v2007 = vsel %vm342, %v1982, 0
      %v2010 = vsel %vm342, %v1983, 0
      %2012 = vmatpush.bf16.msra.mxu0 0
      %2013 = vmatpush.bf16.msra.mxu0 0
      %2014 = vmatpush.bf16.msra.mxu0 0
      %2015 = vmatpush.bf16.msra.mxu0 0
      %2016 = vmatpush.bf16.msra.mxu0 0
      %2017 = vmatpush.bf16.msra.mxu0 0
      %2018 = vmatpush.bf16.msra.mxu0 %v1998
      %2019 = vmatpush.bf16.msra.mxu0 %v1996
      %2020 = vmatmul.bf16.gmra.mxu0 %v2007
      %v2021 = vpop.f32.mrf.mxu0
      %v2022 = vadd.f32 0.0, %v2021
      %v2023 = vpop.f32.mrf.mxu0
      %v2024 = vadd.f32 0.0, %v2023
      %2025 = vmatmul.bf16.gmra.mxu0 %v2010
      %v2026 = vpop.f32.mrf.mxu0
      %v2027 = vadd.f32 0.0, %v2026
      %v2028 = vpop.f32.mrf.mxu0
      %v2029 = vadd.f32 0.0, %v2028
      %2030 = vdwg.mxu0
      %2031 = vmatpush.bf16.msra.mxu0 0
      %2032 = vmatpush.bf16.msra.mxu0 0
      %2033 = vmatpush.bf16.msra.mxu0 0
      %2034 = vmatpush.bf16.msra.mxu0 0
      %2035 = vmatpush.bf16.msra.mxu0 0
      %2036 = vmatpush.bf16.msra.mxu0 0
      %2037 = vmatpush.bf16.msra.mxu0 %v1999
      %2038 = vmatpush.bf16.msra.mxu0 %v1997
      %2039 = vmatmul.bf16.gmra.mxu0 %v2007
      %v2040 = vpop.f32.mrf.mxu0
      %v2041 = vadd.f32 0.0, %v2040
      %v2042 = vpop.f32.mrf.mxu0
      %v2043 = vadd.f32 0.0, %v2042
      %2044 = vmatmul.bf16.gmra.mxu0 %v2010
      %v2045 = vpop.f32.mrf.mxu0
      %v2046 = vadd.f32 0.0, %v2045
      %v2047 = vpop.f32.mrf.mxu0
      %v2048 = vadd.f32 0.0, %v2047
      %2049 = vdwg.mxu0
      %2050 = vmatpush.bf16.msra.mxu0 0
      %2051 = vmatpush.bf16.msra.mxu0 0
      %2052 = vmatpush.bf16.msra.mxu0 0
      %2053 = vmatpush.bf16.msra.mxu0 0
      %2054 = vmatpush.bf16.msra.mxu0 0
      %2055 = vmatpush.bf16.msra.mxu0 0
      %2056 = vmatpush.bf16.msra.mxu0 %v1995
      %2057 = vmatpush.bf16.msra.mxu0 %v1989
      %2058 = vmatmul.bf16.gmra.mxu0 %v2007
      %v2059 = vpop.f32.mrf.mxu0
      %v2060 = vadd.f32 0.0, %v2059
      %v2061 = vpop.f32.mrf.mxu0
      %v2062 = vadd.f32 0.0, %v2061
      %2063 = vmatmul.bf16.gmra.mxu0 %v2010
      %v2064 = vpop.f32.mrf.mxu0
      %v2065 = vadd.f32 0.0, %v2064
      %v2066 = vpop.f32.mrf.mxu0
      %v2067 = vadd.f32 0.0, %v2066
      %2068 = vdwg.mxu0
      %v2069 = vadd.f32 %v1957, %v2022
      %v2070 = vadd.f32 %v1958, %v2041
      %v2071 = vadd.f32 %v1959, %v2060
      %v2072 = vadd.f32 %v1960, %v2024
      %v2073 = vadd.f32 %v1961, %v2043
      %v2074 = vadd.f32 %v1962, %v2062
      %v2075 = vadd.f32 %v1963, %v2027
      %v2076 = vadd.f32 %v1964, %v2046
      %v2077 = vadd.f32 %v1965, %v2065
      %v2078 = vadd.f32 %v1966, %v2029
      %v2079 = vadd.f32 %v1967, %v2048
      %v2080 = vadd.f32 %v1968, %v2067
      %s2081 = scalar_lea.vmem %s3, 80
      %v2082 = vld [vmem:[%s2081] sm:$0xf]
      %v2083 = vld [vmem:[%s2081 + $0x4] sm:$0xf]
      %v2084 = vld [vmem:[%s2081 + $0x8] sm:$0xf]
      %v2085 = vld [vmem:[%s2081 + $0xc] sm:$0xf]
      %v2090 = vunpack.c.l.b16 %v2082
      %v2091 = vunpack.c.l.b16 %v2083
      %v2092 = vunpack.c.l.b16 %v2084
      %v2093 = vunpack.c.l.b16 %v2085
      %v2094 = vpack.c.b16 %v2091, %v2090
      %v2095 = vpack.c.b16 %v2093, %v2092
      %2096 = vrot.lane.b32.xlu0 %v1552, 108
      %v2097 = vpop.permute.xlu0 %2096
      %2098 = vrot.lane.b32.xlu0 %v1543, 108
      %v2099 = vpop.permute.xlu0 %2098
      %2100 = vrot.lane.b32.xlu0 %v1559, 108
      %v2101 = vpop.permute.xlu0 %2100
      %2102 = vrot.lane.b32.xlu0 %v1555, 108
      %v2103 = vpop.permute.xlu0 %2102
      %2104 = vrot.lane.b32.xlu0 %v1545, 108
      %v2105 = vpop.permute.xlu0 %2104
      %2106 = vrot.lane.b32.xlu0 %v1562, 108
      %v2107 = vpop.permute.xlu0 %2106
      %v2108 = vsel %vm851, %v2097, %v2099
      %v2109 = vsel %vm851, %v2099, %v2101
      %v2110 = vsel %vm851, %v2103, %v2105
      %v2111 = vsel %vm851, %v2105, %v2107
      %v2119 = vsel %vm342, %v2094, 0
      %v2122 = vsel %vm342, %v2095, 0
      %2124 = vmatpush.bf16.msra.mxu0 0
      %2125 = vmatpush.bf16.msra.mxu0 0
      %2126 = vmatpush.bf16.msra.mxu0 0
      %2127 = vmatpush.bf16.msra.mxu0 0
      %2128 = vmatpush.bf16.msra.mxu0 0
      %2129 = vmatpush.bf16.msra.mxu0 0
      %2130 = vmatpush.bf16.msra.mxu0 %v2110
      %2131 = vmatpush.bf16.msra.mxu0 %v2108
      %2132 = vmatmul.bf16.gmra.mxu0 %v2119
      %v2133 = vpop.f32.mrf.mxu0
      %v2134 = vadd.f32 0.0, %v2133
      %v2135 = vpop.f32.mrf.mxu0
      %v2136 = vadd.f32 0.0, %v2135
      %2137 = vmatmul.bf16.gmra.mxu0 %v2122
      %v2138 = vpop.f32.mrf.mxu0
      %v2139 = vadd.f32 0.0, %v2138
      %v2140 = vpop.f32.mrf.mxu0
      %v2141 = vadd.f32 0.0, %v2140
      %2142 = vdwg.mxu0
      %2143 = vmatpush.bf16.msra.mxu0 0
      %2144 = vmatpush.bf16.msra.mxu0 0
      %2145 = vmatpush.bf16.msra.mxu0 0
      %2146 = vmatpush.bf16.msra.mxu0 0
      %2147 = vmatpush.bf16.msra.mxu0 0
      %2148 = vmatpush.bf16.msra.mxu0 0
      %2149 = vmatpush.bf16.msra.mxu0 %v2111
      %2150 = vmatpush.bf16.msra.mxu0 %v2109
      %2151 = vmatmul.bf16.gmra.mxu0 %v2119
      %v2152 = vpop.f32.mrf.mxu0
      %v2153 = vadd.f32 0.0, %v2152
      %v2154 = vpop.f32.mrf.mxu0
      %v2155 = vadd.f32 0.0, %v2154
      %2156 = vmatmul.bf16.gmra.mxu0 %v2122
      %v2157 = vpop.f32.mrf.mxu0
      %v2158 = vadd.f32 0.0, %v2157
      %v2159 = vpop.f32.mrf.mxu0
      %v2160 = vadd.f32 0.0, %v2159
      %2161 = vdwg.mxu0
      %2162 = vmatpush.bf16.msra.mxu0 0
      %2163 = vmatpush.bf16.msra.mxu0 0
      %2164 = vmatpush.bf16.msra.mxu0 0
      %2165 = vmatpush.bf16.msra.mxu0 0
      %2166 = vmatpush.bf16.msra.mxu0 0
      %2167 = vmatpush.bf16.msra.mxu0 0
      %2168 = vmatpush.bf16.msra.mxu0 %v2107
      %2169 = vmatpush.bf16.msra.mxu0 %v2101
      %2170 = vmatmul.bf16.gmra.mxu0 %v2119
      %v2171 = vpop.f32.mrf.mxu0
      %v2172 = vadd.f32 0.0, %v2171
      %v2173 = vpop.f32.mrf.mxu0
      %v2174 = vadd.f32 0.0, %v2173
      %2175 = vmatmul.bf16.gmra.mxu0 %v2122
      %v2176 = vpop.f32.mrf.mxu0
      %v2177 = vadd.f32 0.0, %v2176
      %v2178 = vpop.f32.mrf.mxu0
      %v2179 = vadd.f32 0.0, %v2178
      %2180 = vdwg.mxu0
      %v2181 = vadd.f32 %v2069, %v2134
      %v2182 = vadd.f32 %v2070, %v2153
      %v2183 = vadd.f32 %v2071, %v2172
      %v2184 = vadd.f32 %v2072, %v2136
      %v2185 = vadd.f32 %v2073, %v2155
      %v2186 = vadd.f32 %v2074, %v2174
      %v2187 = vadd.f32 %v2075, %v2139
      %v2188 = vadd.f32 %v2076, %v2158
      %v2189 = vadd.f32 %v2077, %v2177
      %v2190 = vadd.f32 %v2078, %v2141
      %v2191 = vadd.f32 %v2079, %v2160
      %v2192 = vadd.f32 %v2080, %v2179
      %s2193 = scalar_lea.vmem %s3, 96
      %v2194 = vld [vmem:[%s2193] sm:$0xf]
      %v2195 = vld [vmem:[%s2193 + $0x4] sm:$0xf]
      %v2196 = vld [vmem:[%s2193 + $0x8] sm:$0xf]
      %v2197 = vld [vmem:[%s2193 + $0xc] sm:$0xf]
      %v2202 = vunpack.c.l.b16 %v2194
      %v2203 = vunpack.c.l.b16 %v2195
      %v2204 = vunpack.c.l.b16 %v2196
      %v2205 = vunpack.c.l.b16 %v2197
      %v2206 = vpack.c.b16 %v2203, %v2202
      %v2207 = vpack.c.b16 %v2205, %v2204
      %2208 = vrot.lane.b32.xlu0 %v1552, 92
      %v2209 = vpop.permute.xlu0 %2208
      %2210 = vrot.lane.b32.xlu0 %v1543, 92
      %v2211 = vpop.permute.xlu0 %2210
      %2212 = vrot.lane.b32.xlu0 %v1559, 92
      %v2213 = vpop.permute.xlu0 %2212
      %2214 = vrot.lane.b32.xlu0 %v1555, 92
      %v2215 = vpop.permute.xlu0 %2214
      %2216 = vrot.lane.b32.xlu0 %v1545, 92
      %v2217 = vpop.permute.xlu0 %2216
      %2218 = vrot.lane.b32.xlu0 %v1562, 92
      %v2219 = vpop.permute.xlu0 %2218
      %v2220 = vsel %vm964, %v2209, %v2211
      %v2221 = vsel %vm964, %v2211, %v2213
      %v2222 = vsel %vm964, %v2215, %v2217
      %v2223 = vsel %vm964, %v2217, %v2219
      %v2231 = vsel %vm342, %v2206, 0
      %v2234 = vsel %vm342, %v2207, 0
      %2236 = vmatpush.bf16.msra.mxu0 0
      %2237 = vmatpush.bf16.msra.mxu0 0
      %2238 = vmatpush.bf16.msra.mxu0 0
      %2239 = vmatpush.bf16.msra.mxu0 0
      %2240 = vmatpush.bf16.msra.mxu0 0
      %2241 = vmatpush.bf16.msra.mxu0 0
      %2242 = vmatpush.bf16.msra.mxu0 %v2222
      %2243 = vmatpush.bf16.msra.mxu0 %v2220
      %2244 = vmatmul.bf16.gmra.mxu0 %v2231
      %v2245 = vpop.f32.mrf.mxu0
      %v2246 = vadd.f32 0.0, %v2245
      %v2247 = vpop.f32.mrf.mxu0
      %v2248 = vadd.f32 0.0, %v2247
      %2249 = vmatmul.bf16.gmra.mxu0 %v2234
      %v2250 = vpop.f32.mrf.mxu0
      %v2251 = vadd.f32 0.0, %v2250
      %v2252 = vpop.f32.mrf.mxu0
      %v2253 = vadd.f32 0.0, %v2252
      %2254 = vdwg.mxu0
      %2255 = vmatpush.bf16.msra.mxu0 0
      %2256 = vmatpush.bf16.msra.mxu0 0
      %2257 = vmatpush.bf16.msra.mxu0 0
      %2258 = vmatpush.bf16.msra.mxu0 0
      %2259 = vmatpush.bf16.msra.mxu0 0
      %2260 = vmatpush.bf16.msra.mxu0 0
      %2261 = vmatpush.bf16.msra.mxu0 %v2223
      %2262 = vmatpush.bf16.msra.mxu0 %v2221
      %2263 = vmatmul.bf16.gmra.mxu0 %v2231
      %v2264 = vpop.f32.mrf.mxu0
      %v2265 = vadd.f32 0.0, %v2264
      %v2266 = vpop.f32.mrf.mxu0
      %v2267 = vadd.f32 0.0, %v2266
      %2268 = vmatmul.bf16.gmra.mxu0 %v2234
      %v2269 = vpop.f32.mrf.mxu0
      %v2270 = vadd.f32 0.0, %v2269
      %v2271 = vpop.f32.mrf.mxu0
      %v2272 = vadd.f32 0.0, %v2271
      %2273 = vdwg.mxu0
      %2274 = vmatpush.bf16.msra.mxu0 0
      %2275 = vmatpush.bf16.msra.mxu0 0
      %2276 = vmatpush.bf16.msra.mxu0 0
      %2277 = vmatpush.bf16.msra.mxu0 0
      %2278 = vmatpush.bf16.msra.mxu0 0
      %2279 = vmatpush.bf16.msra.mxu0 0
      %2280 = vmatpush.bf16.msra.mxu0 %v2219
      %2281 = vmatpush.bf16.msra.mxu0 %v2213
      %2282 = vmatmul.bf16.gmra.mxu0 %v2231
      %v2283 = vpop.f32.mrf.mxu0
      %v2284 = vadd.f32 0.0, %v2283
      %v2285 = vpop.f32.mrf.mxu0
      %v2286 = vadd.f32 0.0, %v2285
      %2287 = vmatmul.bf16.gmra.mxu0 %v2234
      %v2288 = vpop.f32.mrf.mxu0
      %v2289 = vadd.f32 0.0, %v2288
      %v2290 = vpop.f32.mrf.mxu0
      %v2291 = vadd.f32 0.0, %v2290
      %2292 = vdwg.mxu0
      %v2293 = vadd.f32 %v2181, %v2246
      %v2294 = vadd.f32 %v2182, %v2265
      %v2295 = vadd.f32 %v2183, %v2284
      %v2296 = vadd.f32 %v2184, %v2248
      %v2297 = vadd.f32 %v2185, %v2267
      %v2298 = vadd.f32 %v2186, %v2286
      %v2299 = vadd.f32 %v2187, %v2251
      %v2300 = vadd.f32 %v2188, %v2270
      %v2301 = vadd.f32 %v2189, %v2289
      %v2302 = vadd.f32 %v2190, %v2253
      %v2303 = vadd.f32 %v2191, %v2272
      %v2304 = vadd.f32 %v2192, %v2291
      %s2305 = scalar_lea.vmem %s3, 112
      %v2306 = vld [vmem:[%s2305] sm:$0xf]
      %v2307 = vld [vmem:[%s2305 + $0x4] sm:$0xf]
      %v2308 = vld [vmem:[%s2305 + $0x8] sm:$0xf]
      %v2309 = vld [vmem:[%s2305 + $0xc] sm:$0xf]
      %v2314 = vunpack.c.l.b16 %v2306
      %v2315 = vunpack.c.l.b16 %v2307
      %v2316 = vunpack.c.l.b16 %v2308
      %v2317 = vunpack.c.l.b16 %v2309
      %v2318 = vpack.c.b16 %v2315, %v2314
      %v2319 = vpack.c.b16 %v2317, %v2316
      %2320 = vrot.lane.b32.xlu0 %v1552, 91
      %v2321 = vpop.permute.xlu0 %2320
      %2322 = vrot.lane.b32.xlu0 %v1543, 91
      %v2323 = vpop.permute.xlu0 %2322
      %2324 = vrot.lane.b32.xlu0 %v1559, 91
      %v2325 = vpop.permute.xlu0 %2324
      %2326 = vrot.lane.b32.xlu0 %v1555, 91
      %v2327 = vpop.permute.xlu0 %2326
      %2328 = vrot.lane.b32.xlu0 %v1545, 91
      %v2329 = vpop.permute.xlu0 %2328
      %2330 = vrot.lane.b32.xlu0 %v1562, 91
      %v2331 = vpop.permute.xlu0 %2330
      %v2332 = vsel %vm1077, %v2321, %v2323
      %v2333 = vsel %vm1077, %v2323, %v2325
      %v2334 = vsel %vm1077, %v2327, %v2329
      %v2335 = vsel %vm1077, %v2329, %v2331
      %v2343 = vsel %vm342, %v2318, 0
      %v2346 = vsel %vm342, %v2319, 0
      %2348 = vmatpush.bf16.msra.mxu0 0
      %2349 = vmatpush.bf16.msra.mxu0 0
      %2350 = vmatpush.bf16.msra.mxu0 0
      %2351 = vmatpush.bf16.msra.mxu0 0
      %2352 = vmatpush.bf16.msra.mxu0 0
      %2353 = vmatpush.bf16.msra.mxu0 0
      %2354 = vmatpush.bf16.msra.mxu0 %v2334
      %2355 = vmatpush.bf16.msra.mxu0 %v2332
      %2356 = vmatmul.bf16.gmra.mxu0 %v2343
      %v2357 = vpop.f32.mrf.mxu0
      %v2358 = vadd.f32 0.0, %v2357
      %v2359 = vpop.f32.mrf.mxu0
      %v2360 = vadd.f32 0.0, %v2359
      %2361 = vmatmul.bf16.gmra.mxu0 %v2346
      %v2362 = vpop.f32.mrf.mxu0
      %v2363 = vadd.f32 0.0, %v2362
      %v2364 = vpop.f32.mrf.mxu0
      %v2365 = vadd.f32 0.0, %v2364
      %2366 = vdwg.mxu0
      %2367 = vmatpush.bf16.msra.mxu0 0
      %2368 = vmatpush.bf16.msra.mxu0 0
      %2369 = vmatpush.bf16.msra.mxu0 0
      %2370 = vmatpush.bf16.msra.mxu0 0
      %2371 = vmatpush.bf16.msra.mxu0 0
      %2372 = vmatpush.bf16.msra.mxu0 0
      %2373 = vmatpush.bf16.msra.mxu0 %v2335
      %2374 = vmatpush.bf16.msra.mxu0 %v2333
      %2375 = vmatmul.bf16.gmra.mxu0 %v2343
      %v2376 = vpop.f32.mrf.mxu0
      %v2377 = vadd.f32 0.0, %v2376
      %v2378 = vpop.f32.mrf.mxu0
      %v2379 = vadd.f32 0.0, %v2378
      %2380 = vmatmul.bf16.gmra.mxu0 %v2346
      %v2381 = vpop.f32.mrf.mxu0
      %v2382 = vadd.f32 0.0, %v2381
      %v2383 = vpop.f32.mrf.mxu0
      %v2384 = vadd.f32 0.0, %v2383
      %2385 = vdwg.mxu0
      %2386 = vmatpush.bf16.msra.mxu0 0
      %2387 = vmatpush.bf16.msra.mxu0 0
      %2388 = vmatpush.bf16.msra.mxu0 0
      %2389 = vmatpush.bf16.msra.mxu0 0
      %2390 = vmatpush.bf16.msra.mxu0 0
      %2391 = vmatpush.bf16.msra.mxu0 0
      %2392 = vmatpush.bf16.msra.mxu0 %v2331
      %2393 = vmatpush.bf16.msra.mxu0 %v2325
      %2394 = vmatmul.bf16.gmra.mxu0 %v2343
      %v2395 = vpop.f32.mrf.mxu0
      %v2396 = vadd.f32 0.0, %v2395
      %v2397 = vpop.f32.mrf.mxu0
      %v2398 = vadd.f32 0.0, %v2397
      %2399 = vmatmul.bf16.gmra.mxu0 %v2346
      %v2400 = vpop.f32.mrf.mxu0
      %v2401 = vadd.f32 0.0, %v2400
      %v2402 = vpop.f32.mrf.mxu0
      %v2403 = vadd.f32 0.0, %v2402
      %2404 = vdwg.mxu0
      %v2405 = vadd.f32 %v2293, %v2358
      %v2406 = vadd.f32 %v2294, %v2377
      %v2407 = vadd.f32 %v2295, %v2396
      %v2408 = vadd.f32 %v2296, %v2360
      %v2409 = vadd.f32 %v2297, %v2379
      %v2410 = vadd.f32 %v2298, %v2398
      %v2411 = vadd.f32 %v2299, %v2363
      %v2412 = vadd.f32 %v2300, %v2382
      %v2413 = vadd.f32 %v2301, %v2401
      %v2414 = vadd.f32 %v2302, %v2365
      %v2415 = vadd.f32 %v2303, %v2384
      %v2416 = vadd.f32 %v2304, %v2403
      %s2417 = scalar_lea.vmem %s3, 128
      %v2418 = vld [vmem:[%s2417] sm:$0xf]
      %v2419 = vld [vmem:[%s2417 + $0x4] sm:$0xf]
      %v2420 = vld [vmem:[%s2417 + $0x8] sm:$0xf]
      %v2421 = vld [vmem:[%s2417 + $0xc] sm:$0xf]
      %v2426 = vunpack.c.l.b16 %v2418
      %v2427 = vunpack.c.l.b16 %v2419
      %v2428 = vunpack.c.l.b16 %v2420
      %v2429 = vunpack.c.l.b16 %v2421
      %v2430 = vpack.c.b16 %v2427, %v2426
      %v2431 = vpack.c.b16 %v2429, %v2428
      %2432 = vrot.lane.b32.xlu0 %v1552, 90
      %v2433 = vpop.permute.xlu0 %2432
      %2434 = vrot.lane.b32.xlu0 %v1543, 90
      %v2435 = vpop.permute.xlu0 %2434
      %2436 = vrot.lane.b32.xlu0 %v1559, 90
      %v2437 = vpop.permute.xlu0 %2436
      %2438 = vrot.lane.b32.xlu0 %v1555, 90
      %v2439 = vpop.permute.xlu0 %2438
      %2440 = vrot.lane.b32.xlu0 %v1545, 90
      %v2441 = vpop.permute.xlu0 %2440
      %2442 = vrot.lane.b32.xlu0 %v1562, 90
      %v2443 = vpop.permute.xlu0 %2442
      %v2444 = vsel %vm1190, %v2433, %v2435
      %v2445 = vsel %vm1190, %v2435, %v2437
      %v2446 = vsel %vm1190, %v2439, %v2441
      %v2447 = vsel %vm1190, %v2441, %v2443
      %v2455 = vsel %vm342, %v2430, 0
      %v2458 = vsel %vm342, %v2431, 0
      %2460 = vmatpush.bf16.msra.mxu0 0
      %2461 = vmatpush.bf16.msra.mxu0 0
      %2462 = vmatpush.bf16.msra.mxu0 0
      %2463 = vmatpush.bf16.msra.mxu0 0
      %2464 = vmatpush.bf16.msra.mxu0 0
      %2465 = vmatpush.bf16.msra.mxu0 0
      %2466 = vmatpush.bf16.msra.mxu0 %v2446
      %2467 = vmatpush.bf16.msra.mxu0 %v2444
      %2468 = vmatmul.bf16.gmra.mxu0 %v2455
      %v2469 = vpop.f32.mrf.mxu0
      %v2470 = vadd.f32 0.0, %v2469
      %v2471 = vpop.f32.mrf.mxu0
      %v2472 = vadd.f32 0.0, %v2471
      %2473 = vmatmul.bf16.gmra.mxu0 %v2458
      %v2474 = vpop.f32.mrf.mxu0
      %v2475 = vadd.f32 0.0, %v2474
      %v2476 = vpop.f32.mrf.mxu0
      %v2477 = vadd.f32 0.0, %v2476
      %2478 = vdwg.mxu0
      %2479 = vmatpush.bf16.msra.mxu0 0
      %2480 = vmatpush.bf16.msra.mxu0 0
      %2481 = vmatpush.bf16.msra.mxu0 0
      %2482 = vmatpush.bf16.msra.mxu0 0
      %2483 = vmatpush.bf16.msra.mxu0 0
      %2484 = vmatpush.bf16.msra.mxu0 0
      %2485 = vmatpush.bf16.msra.mxu0 %v2447
      %2486 = vmatpush.bf16.msra.mxu0 %v2445
      %2487 = vmatmul.bf16.gmra.mxu0 %v2455
      %v2488 = vpop.f32.mrf.mxu0
      %v2489 = vadd.f32 0.0, %v2488
      %v2490 = vpop.f32.mrf.mxu0
      %v2491 = vadd.f32 0.0, %v2490
      %2492 = vmatmul.bf16.gmra.mxu0 %v2458
      %v2493 = vpop.f32.mrf.mxu0
      %v2494 = vadd.f32 0.0, %v2493
      %v2495 = vpop.f32.mrf.mxu0
      %v2496 = vadd.f32 0.0, %v2495
      %2497 = vdwg.mxu0
      %2498 = vmatpush.bf16.msra.mxu0 0
      %2499 = vmatpush.bf16.msra.mxu0 0
      %2500 = vmatpush.bf16.msra.mxu0 0
      %2501 = vmatpush.bf16.msra.mxu0 0
      %2502 = vmatpush.bf16.msra.mxu0 0
      %2503 = vmatpush.bf16.msra.mxu0 0
      %2504 = vmatpush.bf16.msra.mxu0 %v2443
      %2505 = vmatpush.bf16.msra.mxu0 %v2437
      %2506 = vmatmul.bf16.gmra.mxu0 %v2455
      %v2507 = vpop.f32.mrf.mxu0
      %v2508 = vadd.f32 0.0, %v2507
      %v2509 = vpop.f32.mrf.mxu0
      %v2510 = vadd.f32 0.0, %v2509
      %2511 = vmatmul.bf16.gmra.mxu0 %v2458
      %v2512 = vpop.f32.mrf.mxu0
      %v2513 = vadd.f32 0.0, %v2512
      %v2514 = vpop.f32.mrf.mxu0
      %v2515 = vadd.f32 0.0, %v2514
      %2516 = vdwg.mxu0
      %v2517 = vadd.f32 %v2405, %v2470
      %v2518 = vadd.f32 %v2406, %v2489
      %v2519 = vadd.f32 %v2407, %v2508
      %v2520 = vadd.f32 %v2408, %v2472
      %v2521 = vadd.f32 %v2409, %v2491
      %v2522 = vadd.f32 %v2410, %v2510
      %v2523 = vadd.f32 %v2411, %v2475
      %v2524 = vadd.f32 %v2412, %v2494
      %v2525 = vadd.f32 %v2413, %v2513
      %v2526 = vadd.f32 %v2414, %v2477
      %v2527 = vadd.f32 %v2415, %v2496
      %v2528 = vadd.f32 %v2416, %v2515
      %v2529 = vld [vmem:[%s4] sm:$0xff]
      %v2530 = vld [vmem:[%s4 + $0x8] sm:$0xff]
      %v2531 = vld [vmem:[%s4 + $0x10] sm:$0xff]
      %v2532 = vld [vmem:[%s4 + $0x18] sm:$0xff]
      %2534 = vset.pattern.permute.xlu0 0
      %2535 = vperm.xlu0 %2534, %v2529
      %v2536 = vpop.permute.xlu0 %2535
      %2539 = vset.pattern.permute.xlu0 0
      %2540 = vperm.xlu0 %2539, %v2530
      %v2541 = vpop.permute.xlu0 %2540
      %2544 = vset.pattern.permute.xlu0 0
      %2545 = vperm.xlu0 %2544, %v2531
      %v2546 = vpop.permute.xlu0 %2545
      %2549 = vset.pattern.permute.xlu0 0
      %2550 = vperm.xlu0 %2549, %v2532
      %v2551 = vpop.permute.xlu0 %2550
      %v2553 = vadd.f32 %v2517, %v2536
      %v2554 = vadd.f32 %v2518, %v2536
      %v2555 = vadd.f32 %v2519, %v2536
      %v2556 = vadd.f32 %v2520, %v2541
      %v2557 = vadd.f32 %v2521, %v2541
      %v2558 = vadd.f32 %v2522, %v2541
      %v2559 = vadd.f32 %v2523, %v2546
      %v2560 = vadd.f32 %v2524, %v2546
      %v2561 = vadd.f32 %v2525, %v2546
      %v2562 = vadd.f32 %v2526, %v2551
      %v2563 = vadd.f32 %v2527, %v2551
      %v2564 = vadd.f32 %v2528, %v2551
      %v2565 = vmul.f32 %v2553, %v1313
      %v2566 = vmul.f32 %v2554, %v1314
      %v2567 = vmul.f32 %v2555, %v1315
      %v2568 = vmul.f32 %v2556, %v1313
      %v2569 = vmul.f32 %v2557, %v1314
      %v2570 = vmul.f32 %v2558, %v1315
      %v2571 = vmul.f32 %v2559, %v1313
      %v2572 = vmul.f32 %v2560, %v1314
      %v2573 = vmul.f32 %v2561, %v1315
      %v2574 = vmul.f32 %v2562, %v1313
      %v2575 = vmul.f32 %v2563, %v1314
      %v2576 = vmul.f32 %v2564, %v1315
      %v2577 = vadd.f32 %v2565, %v2566
      %v2578 = vsel %vm1332, %v2567, 0.0
      %v2579 = vadd.f32 %v2577, %v2578
      %2580 = vadd.xlane.f32.xlu0 %v2579
      %v2581 = vpop.xlane.xlu0 %2580
      %v2582 = vadd.f32 %v2568, %v2569
      %v2583 = vsel %vm1332, %v2570, 0.0
      %v2584 = vadd.f32 %v2582, %v2583
      %2585 = vadd.xlane.f32.xlu0 %v2584
      %v2586 = vpop.xlane.xlu0 %2585
      %v2587 = vadd.f32 %v2571, %v2572
      %v2588 = vsel %vm1332, %v2573, 0.0
      %v2589 = vadd.f32 %v2587, %v2588
      %2590 = vadd.xlane.f32.xlu0 %v2589
      %v2591 = vpop.xlane.xlu0 %2590
      %v2592 = vadd.f32 %v2574, %v2575
      %v2593 = vsel %vm1332, %v2576, 0.0
      %v2594 = vadd.f32 %v2592, %v2593
      %2595 = vadd.xlane.f32.xlu0 %v2594
      %v2596 = vpop.xlane.xlu0 %2595
      %v2597 = vmul.f32 %v2581, 0.00390625
      %v2598 = vmul.f32 %v2586, 0.00390625
      %v2599 = vmul.f32 %v2591, 0.00390625
      %v2600 = vmul.f32 %v2596, 0.00390625
      %v2601 = vsub.f32 %v2553, %v2597
      %v2602 = vsub.f32 %v2554, %v2597
      %v2603 = vsub.f32 %v2555, %v2597
      %v2604 = vsub.f32 %v2556, %v2598
      %v2605 = vsub.f32 %v2557, %v2598
      %v2606 = vsub.f32 %v2558, %v2598
      %v2607 = vsub.f32 %v2559, %v2599
      %v2608 = vsub.f32 %v2560, %v2599
      %v2609 = vsub.f32 %v2561, %v2599
      %v2610 = vsub.f32 %v2562, %v2600
      %v2611 = vsub.f32 %v2563, %v2600
      %v2612 = vsub.f32 %v2564, %v2600
      %v2613 = vmul.f32 %v2601, %v1313
      %v2614 = vmul.f32 %v2602, %v1314
      %v2615 = vmul.f32 %v2603, %v1315
      %v2616 = vmul.f32 %v2604, %v1313
      %v2617 = vmul.f32 %v2605, %v1314
      %v2618 = vmul.f32 %v2606, %v1315
      %v2619 = vmul.f32 %v2607, %v1313
      %v2620 = vmul.f32 %v2608, %v1314
      %v2621 = vmul.f32 %v2609, %v1315
      %v2622 = vmul.f32 %v2610, %v1313
      %v2623 = vmul.f32 %v2611, %v1314
      %v2624 = vmul.f32 %v2612, %v1315
      %v2625 = vmul.f32 %v2613, %v2613
      %v2626 = vmul.f32 %v2614, %v2614
      %v2627 = vmul.f32 %v2615, %v2615
      %v2628 = vmul.f32 %v2616, %v2616
      %v2629 = vmul.f32 %v2617, %v2617
      %v2630 = vmul.f32 %v2618, %v2618
      %v2631 = vmul.f32 %v2619, %v2619
      %v2632 = vmul.f32 %v2620, %v2620
      %v2633 = vmul.f32 %v2621, %v2621
      %v2634 = vmul.f32 %v2622, %v2622
      %v2635 = vmul.f32 %v2623, %v2623
      %v2636 = vmul.f32 %v2624, %v2624
      %v2637 = vadd.f32 %v2625, %v2626
      %v2638 = vsel %vm1332, %v2627, 0.0
      %v2639 = vadd.f32 %v2637, %v2638
      %2640 = vadd.xlane.f32.xlu0 %v2639
      %v2641 = vpop.xlane.xlu0 %2640
      %v2642 = vadd.f32 %v2628, %v2629
      %v2643 = vsel %vm1332, %v2630, 0.0
      %v2644 = vadd.f32 %v2642, %v2643
      %2645 = vadd.xlane.f32.xlu0 %v2644
      %v2646 = vpop.xlane.xlu0 %2645
      %v2647 = vadd.f32 %v2631, %v2632
      %v2648 = vsel %vm1332, %v2633, 0.0
      %v2649 = vadd.f32 %v2647, %v2648
      %2650 = vadd.xlane.f32.xlu0 %v2649
      %v2651 = vpop.xlane.xlu0 %2650
      %v2652 = vadd.f32 %v2634, %v2635
      %v2653 = vsel %vm1332, %v2636, 0.0
      %v2654 = vadd.f32 %v2652, %v2653
      %2655 = vadd.xlane.f32.xlu0 %v2654
      %v2656 = vpop.xlane.xlu0 %2655
      %v2657 = vmul.f32 %v2641, 0.00390625
      %v2658 = vmul.f32 %v2646, 0.00390625
      %v2659 = vmul.f32 %v2651, 0.00390625
      %v2660 = vmul.f32 %v2656, 0.00390625
      %v2661 = vadd.f32 %v2657, 1e-05
      %v2662 = vadd.f32 %v2658, 1e-05
      %v2663 = vadd.f32 %v2659, 1e-05
      %v2664 = vadd.f32 %v2660, 1e-05
      %v2665 = vrsqrt.pop %v2661
      %v2666 = vmul.f32 %v2665, %v2661
      %v2667 = vmul.f32 %v2666, %v2665
      %v2668 = vmul.f32 0.5, %v2667
      %v2669 = vsub.f32 1.5, %v2668
      %v2670 = vmul.f32 %v2665, %v2669
      %vm2671 = vweird.f32 %v2661
      %vm2672 = vweird.f32 %v2665
      %vm2673 = vmor %vm2671, %vm2672
      %v2674 = vsel %vm2673, %v2665, %v2670
      %v2675 = vrsqrt.pop %v2662
      %v2676 = vmul.f32 %v2675, %v2662
      %v2677 = vmul.f32 %v2676, %v2675
      %v2678 = vmul.f32 0.5, %v2677
      %v2679 = vsub.f32 1.5, %v2678
      %v2680 = vmul.f32 %v2675, %v2679
      %vm2681 = vweird.f32 %v2662
      %vm2682 = vweird.f32 %v2675
      %vm2683 = vmor %vm2681, %vm2682
      %v2684 = vsel %vm2683, %v2675, %v2680
      %v2685 = vrsqrt.pop %v2663
      %v2686 = vmul.f32 %v2685, %v2663
      %v2687 = vmul.f32 %v2686, %v2685
      %v2688 = vmul.f32 0.5, %v2687
      %v2689 = vsub.f32 1.5, %v2688
      %v2690 = vmul.f32 %v2685, %v2689
      %vm2691 = vweird.f32 %v2663
      %vm2692 = vweird.f32 %v2685
      %vm2693 = vmor %vm2691, %vm2692
      %v2694 = vsel %vm2693, %v2685, %v2690
      %v2695 = vrsqrt.pop %v2664
      %v2696 = vmul.f32 %v2695, %v2664
      %v2697 = vmul.f32 %v2696, %v2695
      %v2698 = vmul.f32 0.5, %v2697
      %v2699 = vsub.f32 1.5, %v2698
      %v2700 = vmul.f32 %v2695, %v2699
      %vm2701 = vweird.f32 %v2664
      %vm2702 = vweird.f32 %v2695
      %vm2703 = vmor %vm2701, %vm2702
      %v2704 = vsel %vm2703, %v2695, %v2700
      %v2705 = vmul.f32 %v2601, %v2674
      %v2706 = vmul.f32 %v2602, %v2674
      %v2707 = vmul.f32 %v2603, %v2674
      %v2708 = vmul.f32 %v2604, %v2684
      %v2709 = vmul.f32 %v2605, %v2684
      %v2710 = vmul.f32 %v2606, %v2684
      %v2711 = vmul.f32 %v2607, %v2694
      %v2712 = vmul.f32 %v2608, %v2694
      %v2713 = vmul.f32 %v2609, %v2694
      %v2714 = vmul.f32 %v2610, %v2704
      %v2715 = vmul.f32 %v2611, %v2704
      %v2716 = vmul.f32 %v2612, %v2704
      %v2717 = vmax.f32 %v2705, 0.0
      %v2718 = vmax.f32 %v2706, 0.0
      %v2719 = vmax.f32 %v2707, 0.0
      %v2720 = vmax.f32 %v2708, 0.0
      %v2721 = vmax.f32 %v2709, 0.0
      %v2722 = vmax.f32 %v2710, 0.0
      %v2723 = vmax.f32 %v2711, 0.0
      %v2724 = vmax.f32 %v2712, 0.0
      %v2725 = vmax.f32 %v2713, 0.0
      %v2726 = vmax.f32 %v2714, 0.0
      %v2727 = vmax.f32 %v2715, 0.0
      %v2728 = vmax.f32 %v2716, 0.0
      %v2729 = vmul.f32 %v2717, %v1313
      %v2730 = vmul.f32 %v2718, %v1314
      %v2731 = vmul.f32 %v2719, %v1315
      %v2732 = vmul.f32 %v2720, %v1313
      %v2733 = vmul.f32 %v2721, %v1314
      %v2734 = vmul.f32 %v2722, %v1315
      %v2735 = vmul.f32 %v2723, %v1313
      %v2736 = vmul.f32 %v2724, %v1314
      %v2737 = vmul.f32 %v2725, %v1315
      %v2738 = vmul.f32 %v2726, %v1313
      %v2739 = vmul.f32 %v2727, %v1314
      %v2740 = vmul.f32 %v2728, %v1315
      %2753 = vrot.lane.b32.xlu0 %v2729, 19
      %v2754 = vpop.permute.xlu0 %2753
      %2755 = vrot.lane.b32.xlu0 %v2730, 19
      %v2756 = vpop.permute.xlu0 %2755
      %2757 = vrot.lane.b32.xlu0 %v2731, 19
      %v2758 = vpop.permute.xlu0 %2757
      %2759 = vrot.lane.b32.xlu0 %v2732, 19
      %v2760 = vpop.permute.xlu0 %2759
      %2761 = vrot.lane.b32.xlu0 %v2733, 19
      %v2762 = vpop.permute.xlu0 %2761
      %2763 = vrot.lane.b32.xlu0 %v2734, 19
      %v2764 = vpop.permute.xlu0 %2763
      %2765 = vrot.lane.b32.xlu0 %v2735, 19
      %v2766 = vpop.permute.xlu0 %2765
      %2767 = vrot.lane.b32.xlu0 %v2736, 19
      %v2768 = vpop.permute.xlu0 %2767
      %2769 = vrot.lane.b32.xlu0 %v2737, 19
      %v2770 = vpop.permute.xlu0 %2769
      %2771 = vrot.lane.b32.xlu0 %v2738, 19
      %v2772 = vpop.permute.xlu0 %2771
      %2773 = vrot.lane.b32.xlu0 %v2739, 19
      %v2774 = vpop.permute.xlu0 %2773
      %2775 = vrot.lane.b32.xlu0 %v2740, 19
      %v2776 = vpop.permute.xlu0 %2775
      %v2777 = vsel %vm1549, %v2754, %v2756
      %v2778 = vsel %vm1549, %v2756, %v2758
      %v2779 = vsel %vm1549, %v2760, %v2762
      %v2780 = vsel %vm1549, %v2762, %v2764
      %v2781 = vsel %vm1549, %v2766, %v2768
      %v2782 = vsel %vm1549, %v2768, %v2770
      %v2783 = vsel %vm1549, %v2772, %v2774
      %v2784 = vsel %vm1549, %v2774, %v2776
      %v2797 = vadd.f32 %v253, %v2754
      %v2798 = vadd.f32 %v254, %v2777
      %v2799 = vadd.f32 %v255, %v2778
      %v2800 = vadd.f32 %v256, %v2760
      %v2801 = vadd.f32 %v257, %v2779
      %v2802 = vadd.f32 %v258, %v2780
      %v2803 = vadd.f32 %v259, %v2766
      %v2804 = vadd.f32 %v260, %v2781
      %v2805 = vadd.f32 %v261, %v2782
      %v2806 = vadd.f32 %v262, %v2772
      %v2807 = vadd.f32 %v263, %v2783
      %v2808 = vadd.f32 %v264, %v2784
      %2821 = vrot.lane.b32.xlu0 %v2797, 109
      %v2822 = vpop.permute.xlu0 %2821
      %2823 = vrot.lane.b32.xlu0 %v2798, 109
      %v2824 = vpop.permute.xlu0 %2823
      %2825 = vrot.lane.b32.xlu0 %v2799, 109
      %v2826 = vpop.permute.xlu0 %2825
      %2827 = vrot.lane.b32.xlu0 %v2800, 109
      %v2828 = vpop.permute.xlu0 %2827
      %2829 = vrot.lane.b32.xlu0 %v2801, 109
      %v2830 = vpop.permute.xlu0 %2829
      %2831 = vrot.lane.b32.xlu0 %v2802, 109
      %v2832 = vpop.permute.xlu0 %2831
      %2833 = vrot.lane.b32.xlu0 %v2803, 109
      %v2834 = vpop.permute.xlu0 %2833
      %2835 = vrot.lane.b32.xlu0 %v2804, 109
      %v2836 = vpop.permute.xlu0 %2835
      %2837 = vrot.lane.b32.xlu0 %v2805, 109
      %v2838 = vpop.permute.xlu0 %2837
      %2839 = vrot.lane.b32.xlu0 %v2806, 109
      %v2840 = vpop.permute.xlu0 %2839
      %2841 = vrot.lane.b32.xlu0 %v2807, 109
      %v2842 = vpop.permute.xlu0 %2841
      %2843 = vrot.lane.b32.xlu0 %v2808, 109
      %v2844 = vpop.permute.xlu0 %2843
      %vm2845 = vcmask 891904
      %v2846 = vsel %vm2845, %v2822, %v2824
      %v2847 = vsel %vm2845, %v2824, %v2826
      %v2848 = vsel %vm2845, %v2828, %v2830
      %v2849 = vsel %vm2845, %v2830, %v2832
      %v2850 = vsel %vm2845, %v2834, %v2836
      %v2851 = vsel %vm2845, %v2836, %v2838
      %v2852 = vsel %vm2845, %v2840, %v2842
      %v2853 = vsel %vm2845, %v2842, %v2844
      %2866 = vst [vmem:[%s251] sm:$0xff] %v2846
      %2867 = vst [vmem:[%s251 + $0x8] sm:$0xff] %v2847
      %2868 = vst.msk [vmem:[%s251 + $0x10] sm:$0xff] %vm1332, %v2826
      %2869 = vst [vmem:[%s251 + $0x18] sm:$0xff] %v2848
      %2870 = vst [vmem:[%s251 + $0x20] sm:$0xff] %v2849
      %2871 = vst.msk [vmem:[%s251 + $0x28] sm:$0xff] %vm1332, %v2832
      %2872 = vst [vmem:[%s251 + $0x30] sm:$0xff] %v2850
      %2873 = vst [vmem:[%s251 + $0x38] sm:$0xff] %v2851
      %2874 = vst.msk [vmem:[%s251 + $0x40] sm:$0xff] %vm1332, %v2838
      %2875 = vst [vmem:[%s251 + $0x48] sm:$0xff] %v2852
      %2876 = vst [vmem:[%s251 + $0x50] sm:$0xff] %v2853
      %2877 = vst.msk [vmem:[%s251 + $0x58] sm:$0xff] %vm1332, %v2844
      %p2878 = scmp.lt.s32.totalorder %s17, 1
      %s2879 = scalar_select %p2878, %s17, 1
      %s2880 = smul.addr %s2879, 12
      %s2881 = smul.addr %s2880, 8
      %s2882 = scalar_lea.vmem %s6, %s2881
      // Predicated region
      $region45: #{resnet_block_forward.1} parent=43 // pred_check
        %p2883 = pneg %p166
      $region46: #{resnet_block_forward.1} parent=43 // pred_check_branch
        %2885 = sbr.rel (%p2883) target = $region48
      $region47: #{resnet_block_forward.1} parent=43 // pred_region
        _
      $region48: #{resnet_block_forward.1} parent=43 // pred_fallthru
        _
    $region44: #{resnet_block_forward.1} parent=5 // pred_fallthru
      _
    %p2886 = scmp.le.s32.totalorder 2, %s12
    // Predicated region
    $region49: #{resnet_block_forward.1} parent=5 // pred_check
      %p2887 = pneg %p2886
    $region50: #{resnet_block_forward.1} parent=5 // pred_check_branch
      %2889 = sbr.rel (%p2887) target = $region52
    $region51: #{resnet_block_forward.1} parent=5 // pred_region
      %s2890 = ssub.s32 %s12, 2
      // Predicated region
      $region53: #{resnet_block_forward.1} parent=51 // pred_check
        %p2891 = pneg %p172
      $region54: #{resnet_block_forward.1} parent=51 // pred_check_branch
        %2893 = sbr.rel (%p2891) target = $region56
      $region55: #{resnet_block_forward.1} parent=51 // pred_region
        %p2894 = scmp.lt.s32.totalorder %s18, 1
        %s2895 = scalar_select %p2894, %s18, 1
        %s2896 = smul.addr %s2895, 12
        %s2897 = smul.addr %s2896, 8
        %s2898 = scalar_lea.vmem %s6, %s2897
      $region56: #{resnet_block_forward.1} parent=51 // pred_fallthru
        _
    $region52: #{resnet_block_forward.1} parent=5 // pred_fallthru
      _
  $region6: #{resnet_block_forward.1} parent=0 // loop_footer
    %s16 = sadd.s32 1, %s12
  $region7: #{resnet_block_forward.1} parent=0 // loop_footer_branch
    %11 = sbr.rel target = $region3
  $region8: #{resnet_block_forward.1} parent=0 // loop_exit
    _

</llo_original>
